<compile_context>
chip_gen: v7x
topology: tpu7x:2x2x1
jax: 0.10.0
libtpu: 0.0.40
codegen_flags: <defaults>
</compile_context>

<pallas_src>
import functools

import jax
import jax.numpy as jnp
from jax import lax
from jax.experimental import pallas as pl
from jax.experimental.pallas import tpu as pltpu


# ---------------------------------------------------------------------------
# Gaussian kernel construction + rotation (tiny 9x9 arrays -> plain JAX glue)
# ---------------------------------------------------------------------------
def get_gaussian_kernel1d(kernel_size: int, sigma):
    ksize_half = (kernel_size - 1) * 0.5
    x = jnp.linspace(-ksize_half, ksize_half, kernel_size)
    pdf = jnp.exp(-0.5 * (x / sigma) ** 2)
    return pdf / pdf.sum()


def get_gaussian_kernel2d(kernel_size, sigma, dtype):
    k1x = get_gaussian_kernel1d(kernel_size[0], sigma[0]).astype(dtype)
    k1y = get_gaussian_kernel1d(kernel_size[1], sigma[1]).astype(dtype)
    return k1y[:, None] @ k1x[None, :]


def rotate_nearest(kernel2d, theta_deg):
    """Nearest-neighbour rotation around the kernel centre with zero fill."""
    # TODO(synk): torchvision's tensor `rotate` uses affine_grid/grid_sample
    # center conventions; this is a direct nearest-neighbour inverse mapping.
    kh, kw = kernel2d.shape
    cy = (kh - 1) * 0.5
    cx = (kw - 1) * 0.5
    th = jnp.deg2rad(theta_deg)
    cos_t, sin_t = jnp.cos(th), jnp.sin(th)
    yy, xx = jnp.meshgrid(
        jnp.arange(kh, dtype=jnp.float32),
        jnp.arange(kw, dtype=jnp.float32),
        indexing="ij",
    )
    xs = cos_t * (xx - cx) + sin_t * (yy - cy) + cx
    ys = -sin_t * (xx - cx) + cos_t * (yy - cy) + cy
    xi = jnp.round(xs).astype(jnp.int32)
    yi = jnp.round(ys).astype(jnp.int32)
    valid = (xi >= 0) & (xi < kw) & (yi >= 0) & (yi < kh)
    xi = jnp.clip(xi, 0, kw - 1)
    yi = jnp.clip(yi, 0, kh - 1)
    vals = kernel2d[yi, xi]
    return jnp.where(valid, vals, jnp.zeros_like(vals)).astype(kernel2d.dtype)


# ---------------------------------------------------------------------------
# Banded matrix: the horizontal conv pass becomes an MXU matmul
# ---------------------------------------------------------------------------
def _make_band(kernel2d, in_w, out_w, shift):
    """band[a, p, j] = kernel2d[a, p - j + shift] when the tap is in range, else 0.

    Single-strip case: in_w == out_w == W, shift == pad_w (truncated band; the
    truncation reproduces 'same' zero padding at the left/right image edges).
    Strip case: in_w == Ws + Kw - 1, shift == 0 (uniform band; the edges are
    handled by zeroed halo columns in the padded scratch).
    """
    Kh, Kw = kernel2d.shape
    p = jnp.arange(in_w)[:, None]                 # (in_w, 1)
    j = jnp.arange(out_w)[None, :]                # (1, out_w)
    b = p - j + shift
    valid = (b >= 0) & (b < Kw)
    bc = jnp.clip(b, 0, Kw - 1)
    band = jnp.where(valid[None, :, :], kernel2d.astype(jnp.float32)[:, bc], 0.0)
    return band                                    # (Kh, in_w, out_w) float32


# ---------------------------------------------------------------------------
# Pallas kernel: depthwise KhxKw cross-correlation, row padding done in-kernel
# ---------------------------------------------------------------------------
def _blur_kernel(band_ref, x_ref, o_ref, xpad_ref, acc_ref, *,
                 H, W, Kh, Kw, TILE_N, WS, N_STRIPS, PAD_TOP, COL_X):
    # band_ref: (Kh, in_w, WS) f32 in VMEM (constant index_map -> resident)
    # x_ref:    (TILE_N, H, W) image tile in VMEM
    # o_ref:    (TILE_N, H, W) output tile in VMEM
    # xpad_ref: (TILE_N, Hp2, Wp) f32 VMEM scratch (row-padded staging tile)
    # acc_ref:  (TILE_N*H, WS)  f32 VMEM accumulator
    pad_h = (Kh - 1) // 2
    pad_bot = Kh - 1 - pad_h
    r_base = PAD_TOP - pad_h                       # >= 0
    Hp2 = xpad_ref.shape[1]
    Wp = xpad_ref.shape[2]
    in_w = band_ref.shape[1]
    f32 = jnp.float32

    # Halo-only zeroing (NOT the whole scratch): the interior is fully
    # overwritten by the staging copy below.  Re-done every grid step so the
    # kernel stays correct when the "parallel" axis is split across TensorCores.
    if PAD_TOP > 0:
        xpad_ref[:, 0:PAD_TOP, :] = jnp.zeros((TILE_N, PAD_TOP, Wp), f32)
    if pad_bot > 0:
        xpad_ref[:, PAD_TOP + H:Hp2, :] = jnp.zeros((TILE_N, pad_bot, Wp), f32)
    if COL_X > 0:
        xpad_ref[:, :, 0:COL_X] = jnp.zeros((TILE_N, Hp2, COL_X), f32)
    if COL_X + W < Wp:
        xpad_ref[:, :, COL_X + W:Wp] = jnp.zeros((TILE_N, Hp2, Wp - COL_X - W), f32)

    # Stage the image tile into the row-padded scratch.  PAD_TOP is a multiple
    # of 8, so the write lands at a sublane-aligned row base.
    xpad_ref[:, PAD_TOP:PAD_TOP + H, COL_X:COL_X + W] = x_ref[...].astype(f32)

    # Depthwise conv as Kh banded MXU matmuls per width strip; all TILE_N
    # channels are fused into the matmul M dimension (M = TILE_N * H).
    for s in range(N_STRIPS):                      # static unroll
        col0 = s * WS                              # 128-aligned when WS % 128 == 0
        for a in range(Kh):                        # static unroll over kernel rows
            slab = xpad_ref[:, r_base + a:r_base + a + H, col0:col0 + in_w]
            slab = slab.reshape(TILE_N * H, in_w)  # fuse channels into M
            contrib = jnp.dot(slab, band_ref[a],
                              preferred_element_type=jnp.float32)
            if a == 0:
                acc_ref[...] = contrib
            else:
                acc_ref[...] += contrib
        # TODO(synk): for W < 128 these stores are lane-masked; a lane-dense
        # folded layout (H folded into lanes) would need a rebuilt band.
        o_ref[:, :, col0:col0 + WS] = (
            acc_ref[...].reshape(TILE_N, H, WS).astype(o_ref.dtype))


# ---------------------------------------------------------------------------
# Tiling / budget heuristics (generation-aware)
# ---------------------------------------------------------------------------
def _vmem_cap_bytes():
    """Scoped-VMEM cap: ~48 MiB on v7x (64 MiB phys), ~96 MiB on v5e/v6e (128 MiB)."""
    phys = 128 << 20
    try:
        info = pltpu.get_tpu_info()
        phys = int(getattr(info, "vmem_capacity_bytes", phys) or phys)
    except Exception:
        pass
    return min((phys * 3) // 4, 100 << 20)


def _pick_strip(W, Kw):
    """Width-strip size: cuts band FLOPs/VMEM from O(W^2) to O(W*(Ws+Kw))."""
    for ws in (256, 128):
        if W > ws and W % ws == 0:
            return ws, W // ws
    # TODO(synk): widths that are not multiples of 128 fall back to a single
    # dense truncated band -- fine for small W, wasteful for very large W.
    return W, 1


def _pick_tile_n(N, H, W, Hp2, Wp, Ws, itemsize, budget_bytes, max_tile=64):
    """Largest divisor of N (<= max_tile) fitting the VMEM budget, preferring a
    grid extent >= 2 so the parallel axis can split across TensorCores."""
    def step_bytes(t):
        io = (2 + 2) * t * H * W * itemsize              # double-buffered in + out
        scratch = 4 * t * Hp2 * Wp + 4 * t * H * Ws      # padded tile + accumulator
        return io + scratch

    cands = [t for t in range(1, min(N, max_tile) + 1)
             if N % t == 0 and step_bytes(t) <= budget_bytes]
    if not cands:
        # TODO(synk): row-strip (H) tiling with a (Kh-1)-row halo for images too
        # large to hold one padded channel in VMEM (matters on v7x's 64 MiB).
        return 1
    multi = [t for t in cands if N // t >= 2]
    return max(multi) if multi else max(cands)


# ---------------------------------------------------------------------------
# Driver
# ---------------------------------------------------------------------------
def depthwise_blur(img, kernel2d):
    """F.conv2d(img, kernel2d.repeat(C,1,1,1), padding='same', groups=C)."""
    B, C, H, W = img.shape
    Kh, Kw = kernel2d.shape
    # TODO(synk): even kernel sizes need asymmetric padding to match 'same'.
    pad_h = (Kh - 1) // 2
    pad_w = (Kw - 1) // 2
    pad_bot = Kh - 1 - pad_h
    pad_top = (-(-pad_h // 8)) * 8 if pad_h > 0 else 0   # sublane-aligned staging
    N = B * C
    x = img.reshape(N, H, W)                             # collapse batch*channels

    Ws, n_strips = _pick_strip(W, Kw)
    if n_strips == 1:
        in_w, col_x, shift = W, 0, pad_w                 # truncated band, no col pad
        Wp = W
    else:
        in_w, col_x, shift = Ws + Kw - 1, pad_w, 0       # per-strip band + halo cols
        Wp = W + Kw - 1
    Hp2 = pad_top + H + pad_bot

    band = _make_band(kernel2d, in_w, Ws, shift)          # (Kh, in_w, Ws) f32
    band_bytes = 4 * Kh * in_w * Ws

    cap = _vmem_cap_bytes()
    itemsize = jnp.dtype(img.dtype).itemsize
    budget = max(cap - 2 * band_bytes - (6 << 20), 4 << 20)
    tile_n = _pick_tile_n(N, H, W, Hp2, Wp, Ws, itemsize, budget)
    grid = (N // tile_n,)

    step_bytes = (4 * tile_n * H * W * itemsize
                  + 4 * tile_n * Hp2 * Wp + 4 * tile_n * H * Ws)
    vmem_limit = int(min(cap, max(2 * band_bytes + step_bytes + (8 << 20), 16 << 20)))

    kern = functools.partial(
        _blur_kernel, H=H, W=W, Kh=Kh, Kw=Kw, TILE_N=tile_n, WS=Ws,
        N_STRIPS=n_strips, PAD_TOP=pad_top, COL_X=col_x)

    # TODO(synk): pipeline_mode=pl.Buffered(1) on the band spec would drop its
    # pointless second pipeline buffer (v7x VMEM win); kept default for safety.
    out = pl.pallas_call(
        kern,
        out_shape=jax.ShapeDtypeStruct((N, H, W), img.dtype),
        grid_spec=pltpu.PrefetchScalarGridSpec(
            num_scalar_prefetch=0,
            grid=grid,
            in_specs=[
                pl.BlockSpec((Kh, in_w, Ws), lambda i: (0, 0, 0)),   # band (resident)
                pl.BlockSpec((tile_n, H, W), lambda i: (i, 0, 0)),   # image tile
            ],
            out_specs=pl.BlockSpec((tile_n, H, W), lambda i: (i, 0, 0)),
            scratch_shapes=[
                pltpu.VMEM((tile_n, Hp2, Wp), jnp.float32),          # row-padded tile
                pltpu.VMEM((tile_n * H, Ws), jnp.float32),           # f32 accumulator
            ],
        ),
        compiler_params=pltpu.CompilerParams(
            dimension_semantics=("parallel",),
            vmem_limit_bytes=vmem_limit,
        ),
        cost_estimate=pl.CostEstimate(
            flops=2 * N * H * Kh * n_strips * in_w * Ws,
            transcendentals=0,
            bytes_accessed=2 * N * H * W * itemsize + band_bytes,
        ),
    )(band, x)
    return out.reshape(B, C, H, W)


# ---------------------------------------------------------------------------
# Module-equivalent forward
# ---------------------------------------------------------------------------
def gaussian_random_anisotropic_blur(img, key, kernel_size=(9, 9),
                                     sigma_x=(0.1, 2.0), sigma_y=(0.1, 0.15)):
    kx, ky, kt = jax.random.split(key, 3)
    sigmay = jax.random.uniform(ky, (), minval=min(sigma_y), maxval=max(sigma_y))
    sigmax = jax.random.uniform(kx, (), minval=min(sigma_x), maxval=max(sigma_x))
    theta = jax.random.uniform(kt, (), minval=0.0, maxval=360.0)

    kernel = get_gaussian_kernel2d(kernel_size, [sigmax, sigmay], img.dtype)
    rotated_kernel = rotate_nearest(kernel, theta)
    return depthwise_blur(img, rotated_kernel), rotated_kernel


# ---------------------------------------------------------------------------
if __name__ == "__main__":
    key = jax.random.PRNGKey(0)
    k_img, k_blur = jax.random.split(key)

    B, C, H, W = 2, 4, 16, 16
    img = jax.random.normal(k_img, (B, C, H, W), dtype=jnp.float32)

    out, rot_kernel = gaussian_random_anisotropic_blur(img, k_blur)
    out = jax.block_until_ready(out)

    # Pure-JAX reference: depthwise (groups=C) conv with 'SAME' padding.
    rhs = jnp.tile(rot_kernel[None, None, :, :].astype(jnp.float32), (C, 1, 1, 1))
    ref = lax.conv_general_dilated(
        img, rhs,
        window_strides=(1, 1),
        padding="SAME",
        dimension_numbers=("NCHW", "OIHW", "NCHW"),
        feature_group_count=C,
        precision=lax.Precision.HIGHEST,
    )
    assert out.shape == (B, C, H, W)
    # Tolerance re-baselined for default (single-pass bf16) MXU precision.
    max_err = jnp.max(jnp.abs(out - ref))
    assert jnp.allclose(out, ref, atol=3e-2, rtol=3e-2), (
        f"mismatch vs reference: max abs err {max_err}")

    print("KERNEL_OK")
</pallas_src>

<mosaic_0001>
module attributes {stable_mosaic.version = 11 : i64} {
  func.func @_blur_kernel(%arg0: i32, %arg1: memref<9x16x16xf32, #tpu.memory_space<vmem>>, %arg2: memref<4x16x16xf32, #tpu.memory_space<vmem>>, %arg3: memref<4x16x16xf32, #tpu.memory_space<vmem>>, %arg4: memref<4x28x16xf32, #tpu.memory_space<vmem>>, %arg5: memref<64x16xf32, #tpu.memory_space<vmem>>) attributes {dimension_semantics = [#tpu.dimension_semantics<parallel>], iteration_bounds = array<i64: 2>, scalar_prefetch = 0 : i64, scratch_operands = 2 : i64, tpu.core_type = #tpu.core_type<tc>, window_params = [{pipeline_mode = #tpu.pipeline_mode<synchronous>, transform_indices = @transform_0, window_bounds = array<i64: 9, 16, 16>}, {transform_indices = @transform_1, window_bounds = array<i64: 4, 16, 16>}, {transform_indices = @transform_2, window_bounds = array<i64: 4, 16, 16>}]} {
    %cst = arith.constant 0.000000e+00 : f32
    %0 = vector.broadcast %cst : f32 to vector<4x8x16xf32>
    %c0 = arith.constant 0 : index
    %c0_0 = arith.constant 0 : index
    %c0_1 = arith.constant 0 : index
    %1 = vector.load %arg4[%c0, %c0_0, %c0_1] : memref<4x28x16xf32, #tpu.memory_space<vmem>>, vector<4x8x16xf32>
    tpu.vector_store %arg4[%c0, %c0_0, %c0_1], %0 {strides = array<i32>} : memref<4x28x16xf32, #tpu.memory_space<vmem>>, vector<4x8x16xf32>,
    %cst_2 = arith.constant 0.000000e+00 : f32
    %2 = vector.broadcast %cst_2 : f32 to vector<4x4x16xf32>
    %c0_3 = arith.constant 0 : index
    %c24 = arith.constant 24 : index
    %c0_4 = arith.constant 0 : index
    %3 = vector.load %arg4[%c0_3, %c24, %c0_4] : memref<4x28x16xf32, #tpu.memory_space<vmem>>, vector<4x4x16xf32>
    tpu.vector_store %arg4[%c0_3, %c24, %c0_4], %2 {strides = array<i32>} : memref<4x28x16xf32, #tpu.memory_space<vmem>>, vector<4x4x16xf32>,
    %c0_5 = arith.constant 0 : index
    %c0_6 = arith.constant 0 : index
    %c0_7 = arith.constant 0 : index
    %4 = vector.load %arg2[%c0_5, %c0_6, %c0_7] : memref<4x16x16xf32, #tpu.memory_space<vmem>>, vector<4x16x16xf32>
    %c0_8 = arith.constant 0 : index
    %c8 = arith.constant 8 : index
    %c0_9 = arith.constant 0 : index
    %5 = vector.load %arg4[%c0_8, %c8, %c0_9] : memref<4x28x16xf32, #tpu.memory_space<vmem>>, vector<4x16x16xf32>
    tpu.vector_store %arg4[%c0_8, %c8, %c0_9], %4 {strides = array<i32>} : memref<4x28x16xf32, #tpu.memory_space<vmem>>, vector<4x16x16xf32>,
    %c0_10 = arith.constant 0 : index
    %c4 = arith.constant 4 : index
    %c0_11 = arith.constant 0 : index
    %6 = vector.load %arg4[%c0_10, %c4, %c0_11] : memref<4x28x16xf32, #tpu.memory_space<vmem>>, vector<4x16x16xf32>
    %7 = vector.shape_cast %6 : vector<4x16x16xf32> to vector<64x16xf32>
    %c0_12 = arith.constant 0 : index
    %c0_13 = arith.constant 0 : index
    %c0_14 = arith.constant 0 : index
    %8 = vector.load %arg1[%c0_12, %c0_13, %c0_14] : memref<9x16x16xf32, #tpu.memory_space<vmem>>, vector<1x16x16xf32>
    %9 = vector.shape_cast %8 : vector<1x16x16xf32> to vector<16x16xf32>
    %cst_15 = arith.constant dense<0.000000e+00> : vector<64x16xf32>
    %10 = tpu.matmul %7, %9, %cst_15 {dimension_numbers = #tpu.dot_dimension_numbers<[1], [0], [0], [1], [0, 0, 1, 1], [], []>} : vector<64x16xf32>, vector<16x16xf32>, vector<64x16xf32> -> vector<64x16xf32>
    %c0_16 = arith.constant 0 : index
    %c0_17 = arith.constant 0 : index
    %11 = vector.load %arg5[%c0_16, %c0_17] : memref<64x16xf32, #tpu.memory_space<vmem>>, vector<64x16xf32>
    tpu.vector_store %arg5[%c0_16, %c0_17], %10 {strides = array<i32>} : memref<64x16xf32, #tpu.memory_space<vmem>>, vector<64x16xf32>,
    %c0_18 = arith.constant 0 : index
    %c5 = arith.constant 5 : index
    %c0_19 = arith.constant 0 : index
    %12 = vector.load %arg4[%c0_18, %c5, %c0_19] : memref<4x28x16xf32, #tpu.memory_space<vmem>>, vector<4x16x16xf32>
    %13 = vector.shape_cast %12 : vector<4x16x16xf32> to vector<64x16xf32>
    %c1 = arith.constant 1 : index
    %c0_20 = arith.constant 0 : index
    %c0_21 = arith.constant 0 : index
    %14 = vector.load %arg1[%c1, %c0_20, %c0_21] : memref<9x16x16xf32, #tpu.memory_space<vmem>>, vector<1x16x16xf32>
    %15 = vector.shape_cast %14 : vector<1x16x16xf32> to vector<16x16xf32>
    %cst_22 = arith.constant dense<0.000000e+00> : vector<64x16xf32>
    %16 = tpu.matmul %13, %15, %cst_22 {dimension_numbers = #tpu.dot_dimension_numbers<[1], [0], [0], [1], [0, 0, 1, 1], [], []>} : vector<64x16xf32>, vector<16x16xf32>, vector<64x16xf32> -> vector<64x16xf32>
    %c0_23 = arith.constant 0 : index
    %c0_24 = arith.constant 0 : index
    %17 = vector.load %arg5[%c0_23, %c0_24] : memref<64x16xf32, #tpu.memory_space<vmem>>, vector<64x16xf32>
    %18 = arith.addf %17, %16 : vector<64x16xf32>
    %c0_25 = arith.constant 0 : index
    %c0_26 = arith.constant 0 : index
    %19 = vector.load %arg5[%c0_25, %c0_26] : memref<64x16xf32, #tpu.memory_space<vmem>>, vector<64x16xf32>
    tpu.vector_store %arg5[%c0_25, %c0_26], %18 {strides = array<i32>} : memref<64x16xf32, #tpu.memory_space<vmem>>, vector<64x16xf32>,
    %c0_27 = arith.constant 0 : index
    %c6 = arith.constant 6 : index
    %c0_28 = arith.constant 0 : index
    %20 = vector.load %arg4[%c0_27, %c6, %c0_28] : memref<4x28x16xf32, #tpu.memory_space<vmem>>, vector<4x16x16xf32>
    %21 = vector.shape_cast %20 : vector<4x16x16xf32> to vector<64x16xf32>
    %c2 = arith.constant 2 : index
    %c0_29 = arith.constant 0 : index
    %c0_30 = arith.constant 0 : index
    %22 = vector.load %arg1[%c2, %c0_29, %c0_30] : memref<9x16x16xf32, #tpu.memory_space<vmem>>, vector<1x16x16xf32>
    %23 = vector.shape_cast %22 : vector<1x16x16xf32> to vector<16x16xf32>
    %cst_31 = arith.constant dense<0.000000e+00> : vector<64x16xf32>
    %24 = tpu.matmul %21, %23, %cst_31 {dimension_numbers = #tpu.dot_dimension_numbers<[1], [0], [0], [1], [0, 0, 1, 1], [], []>} : vector<64x16xf32>, vector<16x16xf32>, vector<64x16xf32> -> vector<64x16xf32>
    %c0_32 = arith.constant 0 : index
    %c0_33 = arith.constant 0 : index
    %25 = vector.load %arg5[%c0_32, %c0_33] : memref<64x16xf32, #tpu.memory_space<vmem>>, vector<64x16xf32>
    %26 = arith.addf %25, %24 : vector<64x16xf32>
    %c0_34 = arith.constant 0 : index
    %c0_35 = arith.constant 0 : index
    %27 = vector.load %arg5[%c0_34, %c0_35] : memref<64x16xf32, #tpu.memory_space<vmem>>, vector<64x16xf32>
    tpu.vector_store %arg5[%c0_34, %c0_35], %26 {strides = array<i32>} : memref<64x16xf32, #tpu.memory_space<vmem>>, vector<64x16xf32>,
    %c0_36 = arith.constant 0 : index
    %c7 = arith.constant 7 : index
    %c0_37 = arith.constant 0 : index
    %28 = vector.load %arg4[%c0_36, %c7, %c0_37] : memref<4x28x16xf32, #tpu.memory_space<vmem>>, vector<4x16x16xf32>
    %29 = vector.shape_cast %28 : vector<4x16x16xf32> to vector<64x16xf32>
    %c3 = arith.constant 3 : index
    %c0_38 = arith.constant 0 : index
    %c0_39 = arith.constant 0 : index
    %30 = vector.load %arg1[%c3, %c0_38, %c0_39] : memref<9x16x16xf32, #tpu.memory_space<vmem>>, vector<1x16x16xf32>
    %31 = vector.shape_cast %30 : vector<1x16x16xf32> to vector<16x16xf32>
    %cst_40 = arith.constant dense<0.000000e+00> : vector<64x16xf32>
    %32 = tpu.matmul %29, %31, %cst_40 {dimension_numbers = #tpu.dot_dimension_numbers<[1], [0], [0], [1], [0, 0, 1, 1], [], []>} : vector<64x16xf32>, vector<16x16xf32>, vector<64x16xf32> -> vector<64x16xf32>
    %c0_41 = arith.constant 0 : index
    %c0_42 = arith.constant 0 : index
    %33 = vector.load %arg5[%c0_41, %c0_42] : memref<64x16xf32, #tpu.memory_space<vmem>>, vector<64x16xf32>
    %34 = arith.addf %33, %32 : vector<64x16xf32>
    %c0_43 = arith.constant 0 : index
    %c0_44 = arith.constant 0 : index
    %35 = vector.load %arg5[%c0_43, %c0_44] : memref<64x16xf32, #tpu.memory_space<vmem>>, vector<64x16xf32>
    tpu.vector_store %arg5[%c0_43, %c0_44], %34 {strides = array<i32>} : memref<64x16xf32, #tpu.memory_space<vmem>>, vector<64x16xf32>,
    %c0_45 = arith.constant 0 : index
    %c8_46 = arith.constant 8 : index
    %c0_47 = arith.constant 0 : index
    %36 = vector.load %arg4[%c0_45, %c8_46, %c0_47] : memref<4x28x16xf32, #tpu.memory_space<vmem>>, vector<4x16x16xf32>
    %37 = vector.shape_cast %36 : vector<4x16x16xf32> to vector<64x16xf32>
    %c4_48 = arith.constant 4 : index
    %c0_49 = arith.constant 0 : index
    %c0_50 = arith.constant 0 : index
    %38 = vector.load %arg1[%c4_48, %c0_49, %c0_50] : memref<9x16x16xf32, #tpu.memory_space<vmem>>, vector<1x16x16xf32>
    %39 = vector.shape_cast %38 : vector<1x16x16xf32> to vector<16x16xf32>
    %cst_51 = arith.constant dense<0.000000e+00> : vector<64x16xf32>
    %40 = tpu.matmul %37, %39, %cst_51 {dimension_numbers = #tpu.dot_dimension_numbers<[1], [0], [0], [1], [0, 0, 1, 1], [], []>} : vector<64x16xf32>, vector<16x16xf32>, vector<64x16xf32> -> vector<64x16xf32>
    %c0_52 = arith.constant 0 : index
    %c0_53 = arith.constant 0 : index
    %41 = vector.load %arg5[%c0_52, %c0_53] : memref<64x16xf32, #tpu.memory_space<vmem>>, vector<64x16xf32>
    %42 = arith.addf %41, %40 : vector<64x16xf32>
    %c0_54 = arith.constant 0 : index
    %c0_55 = arith.constant 0 : index
    %43 = vector.load %arg5[%c0_54, %c0_55] : memref<64x16xf32, #tpu.memory_space<vmem>>, vector<64x16xf32>
    tpu.vector_store %arg5[%c0_54, %c0_55], %42 {strides = array<i32>} : memref<64x16xf32, #tpu.memory_space<vmem>>, vector<64x16xf32>,
    %c0_56 = arith.constant 0 : index
    %c9 = arith.constant 9 : index
    %c0_57 = arith.constant 0 : index
    %44 = vector.load %arg4[%c0_56, %c9, %c0_57] : memref<4x28x16xf32, #tpu.memory_space<vmem>>, vector<4x16x16xf32>
    %45 = vector.shape_cast %44 : vector<4x16x16xf32> to vector<64x16xf32>
    %c5_58 = arith.constant 5 : index
    %c0_59 = arith.constant 0 : index
    %c0_60 = arith.constant 0 : index
    %46 = vector.load %arg1[%c5_58, %c0_59, %c0_60] : memref<9x16x16xf32, #tpu.memory_space<vmem>>, vector<1x16x16xf32>
    %47 = vector.shape_cast %46 : vector<1x16x16xf32> to vector<16x16xf32>
    %cst_61 = arith.constant dense<0.000000e+00> : vector<64x16xf32>
    %48 = tpu.matmul %45, %47, %cst_61 {dimension_numbers = #tpu.dot_dimension_numbers<[1], [0], [0], [1], [0, 0, 1, 1], [], []>} : vector<64x16xf32>, vector<16x16xf32>, vector<64x16xf32> -> vector<64x16xf32>
    %c0_62 = arith.constant 0 : index
    %c0_63 = arith.constant 0 : index
    %49 = vector.load %arg5[%c0_62, %c0_63] : memref<64x16xf32, #tpu.memory_space<vmem>>, vector<64x16xf32>
    %50 = arith.addf %49, %48 : vector<64x16xf32>
    %c0_64 = arith.constant 0 : index
    %c0_65 = arith.constant 0 : index
    %51 = vector.load %arg5[%c0_64, %c0_65] : memref<64x16xf32, #tpu.memory_space<vmem>>, vector<64x16xf32>
    tpu.vector_store %arg5[%c0_64, %c0_65], %50 {strides = array<i32>} : memref<64x16xf32, #tpu.memory_space<vmem>>, vector<64x16xf32>,
    %c0_66 = arith.constant 0 : index
    %c10 = arith.constant 10 : index
    %c0_67 = arith.constant 0 : index
    %52 = vector.load %arg4[%c0_66, %c10, %c0_67] : memref<4x28x16xf32, #tpu.memory_space<vmem>>, vector<4x16x16xf32>
    %53 = vector.shape_cast %52 : vector<4x16x16xf32> to vector<64x16xf32>
    %c6_68 = arith.constant 6 : index
    %c0_69 = arith.constant 0 : index
    %c0_70 = arith.constant 0 : index
    %54 = vector.load %arg1[%c6_68, %c0_69, %c0_70] : memref<9x16x16xf32, #tpu.memory_space<vmem>>, vector<1x16x16xf32>
    %55 = vector.shape_cast %54 : vector<1x16x16xf32> to vector<16x16xf32>
    %cst_71 = arith.constant dense<0.000000e+00> : vector<64x16xf32>
    %56 = tpu.matmul %53, %55, %cst_71 {dimension_numbers = #tpu.dot_dimension_numbers<[1], [0], [0], [1], [0, 0, 1, 1], [], []>} : vector<64x16xf32>, vector<16x16xf32>, vector<64x16xf32> -> vector<64x16xf32>
    %c0_72 = arith.constant 0 : index
    %c0_73 = arith.constant 0 : index
    %57 = vector.load %arg5[%c0_72, %c0_73] : memref<64x16xf32, #tpu.memory_space<vmem>>, vector<64x16xf32>
    %58 = arith.addf %57, %56 : vector<64x16xf32>
    %c0_74 = arith.constant 0 : index
    %c0_75 = arith.constant 0 : index
    %59 = vector.load %arg5[%c0_74, %c0_75] : memref<64x16xf32, #tpu.memory_space<vmem>>, vector<64x16xf32>
    tpu.vector_store %arg5[%c0_74, %c0_75], %58 {strides = array<i32>} : memref<64x16xf32, #tpu.memory_space<vmem>>, vector<64x16xf32>,
    %c0_76 = arith.constant 0 : index
    %c11 = arith.constant 11 : index
    %c0_77 = arith.constant 0 : index
    %60 = vector.load %arg4[%c0_76, %c11, %c0_77] : memref<4x28x16xf32, #tpu.memory_space<vmem>>, vector<4x16x16xf32>
    %61 = vector.shape_cast %60 : vector<4x16x16xf32> to vector<64x16xf32>
    %c7_78 = arith.constant 7 : index
    %c0_79 = arith.constant 0 : index
    %c0_80 = arith.constant 0 : index
    %62 = vector.load %arg1[%c7_78, %c0_79, %c0_80] : memref<9x16x16xf32, #tpu.memory_space<vmem>>, vector<1x16x16xf32>
    %63 = vector.shape_cast %62 : vector<1x16x16xf32> to vector<16x16xf32>
    %cst_81 = arith.constant dense<0.000000e+00> : vector<64x16xf32>
    %64 = tpu.matmul %61, %63, %cst_81 {dimension_numbers = #tpu.dot_dimension_numbers<[1], [0], [0], [1], [0, 0, 1, 1], [], []>} : vector<64x16xf32>, vector<16x16xf32>, vector<64x16xf32> -> vector<64x16xf32>
    %c0_82 = arith.constant 0 : index
    %c0_83 = arith.constant 0 : index
    %65 = vector.load %arg5[%c0_82, %c0_83] : memref<64x16xf32, #tpu.memory_space<vmem>>, vector<64x16xf32>
    %66 = arith.addf %65, %64 : vector<64x16xf32>
    %c0_84 = arith.constant 0 : index
    %c0_85 = arith.constant 0 : index
    %67 = vector.load %arg5[%c0_84, %c0_85] : memref<64x16xf32, #tpu.memory_space<vmem>>, vector<64x16xf32>
    tpu.vector_store %arg5[%c0_84, %c0_85], %66 {strides = array<i32>} : memref<64x16xf32, #tpu.memory_space<vmem>>, vector<64x16xf32>,
    %c0_86 = arith.constant 0 : index
    %c12 = arith.constant 12 : index
    %c0_87 = arith.constant 0 : index
    %68 = vector.load %arg4[%c0_86, %c12, %c0_87] : memref<4x28x16xf32, #tpu.memory_space<vmem>>, vector<4x16x16xf32>
    %69 = vector.shape_cast %68 : vector<4x16x16xf32> to vector<64x16xf32>
    %c8_88 = arith.constant 8 : index
    %c0_89 = arith.constant 0 : index
    %c0_90 = arith.constant 0 : index
    %70 = vector.load %arg1[%c8_88, %c0_89, %c0_90] : memref<9x16x16xf32, #tpu.memory_space<vmem>>, vector<1x16x16xf32>
    %71 = vector.shape_cast %70 : vector<1x16x16xf32> to vector<16x16xf32>
    %cst_91 = arith.constant dense<0.000000e+00> : vector<64x16xf32>
    %72 = tpu.matmul %69, %71, %cst_91 {dimension_numbers = #tpu.dot_dimension_numbers<[1], [0], [0], [1], [0, 0, 1, 1], [], []>} : vector<64x16xf32>, vector<16x16xf32>, vector<64x16xf32> -> vector<64x16xf32>
    %c0_92 = arith.constant 0 : index
    %c0_93 = arith.constant 0 : index
    %73 = vector.load %arg5[%c0_92, %c0_93] : memref<64x16xf32, #tpu.memory_space<vmem>>, vector<64x16xf32>
    %74 = arith.addf %73, %72 : vector<64x16xf32>
    %c0_94 = arith.constant 0 : index
    %c0_95 = arith.constant 0 : index
    %75 = vector.load %arg5[%c0_94, %c0_95] : memref<64x16xf32, #tpu.memory_space<vmem>>, vector<64x16xf32>
    tpu.vector_store %arg5[%c0_94, %c0_95], %74 {strides = array<i32>} : memref<64x16xf32, #tpu.memory_space<vmem>>, vector<64x16xf32>,
    %c0_96 = arith.constant 0 : index
    %c0_97 = arith.constant 0 : index
    %76 = vector.load %arg5[%c0_96, %c0_97] : memref<64x16xf32, #tpu.memory_space<vmem>>, vector<64x16xf32>
    %77 = vector.shape_cast %76 : vector<64x16xf32> to vector<4x16x16xf32>
    %c0_98 = arith.constant 0 : index
    %c0_99 = arith.constant 0 : index
    %c0_100 = arith.constant 0 : index
    %78 = vector.load %arg3[%c0_98, %c0_99, %c0_100] : memref<4x16x16xf32, #tpu.memory_space<vmem>>, vector<4x16x16xf32>
    tpu.vector_store %arg3[%c0_98, %c0_99, %c0_100], %77 {strides = array<i32>} : memref<4x16x16xf32, #tpu.memory_space<vmem>>, vector<4x16x16xf32>,
    return
  }
  func.func @transform_0(%arg0: i32) -> (i32, i32, i32) {
    %c0_i32 = arith.constant 0 : i32
    %c0_i32_0 = arith.constant 0 : i32
    %c0_i32_1 = arith.constant 0 : i32
    %c0_i32_2 = arith.constant 0 : i32
    return %c0_i32, %c0_i32_0, %c0_i32_1 : i32, i32, i32
  }
  func.func @transform_1(%arg0: i32) -> (i32, i32, i32) {
    %c0_i32 = arith.constant 0 : i32
    %c0_i32_0 = arith.constant 0 : i32
    %c0_i32_1 = arith.constant 0 : i32
    return %arg0, %c0_i32, %c0_i32_0 : i32, i32, i32
  }
  func.func @transform_2(%arg0: i32) -> (i32, i32, i32) {
    %c0_i32 = arith.constant 0 : i32
    %c0_i32_0 = arith.constant 0 : i32
    %c0_i32_1 = arith.constant 0 : i32
    return %arg0, %c0_i32, %c0_i32_0 : i32, i32, i32
  }
}

</mosaic_0001>

<llo_original>
// kernel: tpu_custom_call.1
$region0: #{tpu_custom_call.1}
  #allocation0 [shape = 'u32[]', space=smem, size = 0x4, offset = 0x4, fixed_abs, tag = 'smem constant byte address 0x4 - core index']
  #allocation1 [shape = 'u32[144,128]{1,0:T(1,128)}', space=vmem, size = 0x12000, scoped, tag = 'internal scratch']
  #allocation2 [shape = 'f32[4,28,16]{2,1,0:T(8,128)}', space=vmem, size = 0x10000, scoped, tag = 'scratch operand']
  #allocation3 [shape = 'f32[64,16]{1,0:T(8,128)}', space=vmem, size = 0x8000, scoped, tag = 'scratch operand']
  %s0 = inlined_call_operand.hbm [shape: f32[9,16,16], index: 0, kind: input, shape index: {}]
  %s1 = inlined_call_operand.hbm [shape: f32[8,16,16], index: 1, kind: input, shape index: {}]
  %s2 = inlined_call_operand.hbm [shape: f32[8,16,16], index: 2, kind: output, shape index: {}]
  %s3 = sld [smem:[#allocation0]]
  $region49: #{tpu_custom_call.1} parent=0
    _
  %s5 = ssub.s32 1, %s3
  %s6 = scalar_select 0, %s5, %s3
  $region1: #{tpu_custom_call.1} parent=0
    #allocation4 [shape = 'u8[73728]{0}', space=vmem, size = 0x12000, scoped, tag = 'input window, operand 0, single buffered']
    #allocation5 [shape = 's32[2]{0}', space=sflag, size = 0x8, scoped, tag = 'scoped memory for tpu_custom_call.1']
    #allocation6 [shape = 's32[2]{0}', space=sflag, size = 0x8, scoped, tag = 'scoped memory for tpu_custom_call.1']
    #allocation7 [shape = 'u8[65536]{0}', space=vmem, size = 0x10000, scoped, tag = 'input window, operand 1']
    #allocation8 [shape = 's32[2]{0}', space=sflag, size = 0x8, scoped, tag = 'scoped memory for tpu_custom_call.1']
    #allocation9 [shape = 'u8[65536]{0}', space=vmem, size = 0x10000, scoped, tag = 'output window, operand 0']
    %7 = vsyncpa [#allocation5], 0
    %8 = vsyncpa [#allocation8], 0
    %s9 = scalar_lea.sflag [#allocation8], 1
    %10 = vsyncpa %s9, 0
    %11 = vsyncpa [#allocation6], 0
    %s12 = scalar_lea.sflag [#allocation6], 1
    %13 = vsyncpa %s12, 0
    loop: start=0, step=1, limit=4
    $region2: #{tpu_custom_call.1} parent=1 // loop_pre_header
      _
    $region3: #{tpu_custom_call.1} parent=1 // loop_header
      %s15 = sphi 0, %s19
      %p16 = scmp.ge.s32.totalorder %s15, 4
      %s23 = sphi 0, %s23
      %s25 = sphi 0, %s23
      %s26 = sphi 0, %s25
      %s40 = sphi 0, %s26
      %s46 = sphi 0, %s48
      %s49 = sphi 0, %s46
      %s50 = sphi 0, %s49
      %s66 = sphi 0, %s50
      %s72 = sphi 0, %s74
      %s75 = sphi 0, %s72
      %s76 = sphi 0, %s75
      %s92 = sphi 0, %s76
    $region4: #{tpu_custom_call.1} parent=1 // loop_header_branch
      %18 = sbr.rel (%p16) target = $region8
    $region5: #{tpu_custom_call.1} parent=1 // loop_body
      %s20 = ssub.s32 %s15, 1
      %s21 = ssub.s32 %s15, 2
      %s22 = sadd.s32 %s15, 1
      %s24 = sadd.s32 %s23, 1
      %p27 = scmp.eq.s32.totalorder %s15, 1
      %p28 = scmp.ne.s32.totalorder %s23, %s25
      %p29 = scmp.eq.s32.totalorder %s15, 0
      %p30 = por %p28, %p29
      %p31 = scmp.ne.s32.totalorder %s23, %s25
      %p32 = scmp.eq.s32.totalorder %s20, 1
      %p33 = por %p31, %p32
      %p34 = scmp.ne.s32.totalorder %s25, %s26
      %p35 = scmp.eq.s32.totalorder %s20, 0
      %p36 = por %p34, %p35
      %p37 = scmp.ne.s32.totalorder %s25, %s26
      %p38 = scmp.eq.s32.totalorder %s21, 1
      %p39 = por %p37, %p38
      %p41 = scmp.ne.s32.totalorder %s26, %s40
      %p42 = scmp.eq.s32.totalorder %s21, 0
      %p43 = por %p41, %p42
      %s44 = ssub.s32 %s15, %s22
      %p45 = scmp.eq.s32.totalorder %s44, 0
      %s47 = sadd.s32 %s46, 1
      %s48 = scalar_select %p45, %s46, %s47
      %p51 = pneg %p45
      %p52 = scmp.eq.s32.totalorder %s15, 1
      %p53 = por %p51, %p52
      %p54 = scmp.ne.s32.totalorder %s46, %s49
      %p55 = scmp.eq.s32.totalorder %s15, 0
      %p56 = por %p54, %p55
      %p57 = scmp.ne.s32.totalorder %s46, %s49
      %p58 = scmp.eq.s32.totalorder %s20, 1
      %p59 = por %p57, %p58
      %p60 = scmp.ne.s32.totalorder %s49, %s50
      %p61 = scmp.eq.s32.totalorder %s20, 0
      %p62 = por %p60, %p61
      %p63 = scmp.ne.s32.totalorder %s49, %s50
      %p64 = scmp.eq.s32.totalorder %s21, 1
      %p65 = por %p63, %p64
      %p67 = scmp.ne.s32.totalorder %s50, %s66
      %p68 = scmp.eq.s32.totalorder %s21, 0
      %p69 = por %p67, %p68
      %s70 = ssub.s32 %s15, %s22
      %p71 = scmp.eq.s32.totalorder %s70, 0
      %s73 = sadd.s32 %s72, 1
      %s74 = scalar_select %p71, %s72, %s73
      %p77 = pneg %p71
      %p78 = scmp.eq.s32.totalorder %s15, 1
      %p79 = por %p77, %p78
      %p80 = scmp.ne.s32.totalorder %s72, %s75
      %p81 = scmp.eq.s32.totalorder %s15, 0
      %p82 = por %p80, %p81
      %p83 = scmp.ne.s32.totalorder %s72, %s75
      %p84 = scmp.eq.s32.totalorder %s20, 1
      %p85 = por %p83, %p84
      %p86 = scmp.ne.s32.totalorder %s75, %s76
      %p87 = scmp.eq.s32.totalorder %s20, 0
      %p88 = por %p86, %p87
      %p89 = scmp.ne.s32.totalorder %s75, %s76
      %p90 = scmp.eq.s32.totalorder %s21, 1
      %p91 = por %p89, %p90
      %p93 = scmp.ne.s32.totalorder %s76, %s92
      %p94 = scmp.eq.s32.totalorder %s21, 0
      %p95 = por %p93, %p94
      %p96 = scmp.le.s32.totalorder 1, %s15
      %p97 = scmp.lt.s32.totalorder %s15, 3
      %p98 = pnand %p96, %p97
      %p99 = pneg %p98
      // Predicated region
      $region9: #{tpu_custom_call.1} parent=5 // pred_check
        _
      $region10: #{tpu_custom_call.1} parent=5 // pred_check_branch
        %101 = sbr.rel (%p98) target = $region12
      $region11: #{tpu_custom_call.1} parent=5 // pred_region
        %s102 = ssub.s32 %s15, 1
        // Predicated region
        $region13: #{tpu_custom_call.1} parent=11 // pred_check
          %p103 = pneg %p36
        $region14: #{tpu_custom_call.1} parent=11 // pred_check_branch
          %105 = sbr.rel (%p103) target = $region16
        $region15: #{tpu_custom_call.1} parent=11 // pred_region
          %s107 = ssub.s32 2304, 2304
          %108 = vsyncadd [#allocation5], %s107
          %s109 = sshll.u32 [#allocation4], 4
          %s110 = int_to_ptr.vmem [resolvable:$true] %s109
          %115 = dma.hbm_to_vmem [thread:$0]  %s0, 2304, %s110, [#allocation5], 128, 128, 8
        $region16: #{tpu_custom_call.1} parent=11 // pred_fallthru
          _
      $region12: #{tpu_custom_call.1} parent=5 // pred_fallthru
        _
      %p116 = scmp.lt.s32.totalorder %s15, 2
      // Predicated region
      $region17: #{tpu_custom_call.1} parent=5 // pred_check
        %p117 = pneg %p116
      $region18: #{tpu_custom_call.1} parent=5 // pred_check_branch
        %119 = sbr.rel (%p117) target = $region20
      $region19: #{tpu_custom_call.1} parent=5 // pred_region
        // Predicated region
        $region21: #{tpu_custom_call.1} parent=19 // pred_check
          %p120 = pneg %p56
        $region22: #{tpu_custom_call.1} parent=19 // pred_check_branch
          %122 = sbr.rel (%p120) target = $region24
        $region23: #{tpu_custom_call.1} parent=19 // pred_region
          %s123 = sand.u32 %s46, 1
          %s124 = scalar_lea.sflag [#allocation8], %s123
          %s125 = sand.u32 %s46, 1
          %s126 = smul.addr %s125, 64
          %s127 = scalar_lea.vmem [#allocation7], %s126
          %s128 = smul.u32 4, %s15
          %s130 = ssub.s32 1024, 1024
          %131 = vsyncadd %s124, %s130
          %s132 = smul.addr %s128, 2
          %s133 = smul.addr %s132, 128
          %s134 = scalar_lea.hbm %s1, %s133
          %s135 = sshll.u32 %s127, 4
          %s136 = int_to_ptr.vmem [resolvable:$true] %s135
          %141 = dma.hbm_to_vmem [thread:$0]  %s134, 1024, %s136, %s124, 128, 128, 8
        $region24: #{tpu_custom_call.1} parent=19 // pred_fallthru
          _
      $region20: #{tpu_custom_call.1} parent=5 // pred_fallthru
        _
      %p142 = scmp.le.s32.totalorder 1, %s15
      %p143 = scmp.lt.s32.totalorder %s15, 3
      %p144 = pnand %p142, %p143
      %p145 = pneg %p144
      // Predicated region
      $region25: #{tpu_custom_call.1} parent=5 // pred_check
        _
      $region26: #{tpu_custom_call.1} parent=5 // pred_check_branch
        %147 = sbr.rel (%p144) target = $region28
      $region27: #{tpu_custom_call.1} parent=5 // pred_region
        %s148 = ssub.s32 %s15, 1
        // Predicated region
        $region29: #{tpu_custom_call.1} parent=27 // pred_check
          %p149 = pneg %p36
        $region30: #{tpu_custom_call.1} parent=27 // pred_check_branch
          %151 = sbr.rel (%p149) target = $region32
        $region31: #{tpu_custom_call.1} parent=27 // pred_region
          %152 = dma.done [#allocation5], 2304
        $region32: #{tpu_custom_call.1} parent=27 // pred_fallthru
          _
        %s153 = sand.u32 %s49, 1
        %s154 = scalar_lea.sflag [#allocation8], %s153
        %s155 = sand.u32 %s49, 1
        %s156 = smul.addr %s155, 64
        %s157 = scalar_lea.vmem [#allocation7], %s156
        // Predicated region
        $region33: #{tpu_custom_call.1} parent=27 // pred_check
          %p158 = pneg %p62
        $region34: #{tpu_custom_call.1} parent=27 // pred_check_branch
          %160 = sbr.rel (%p158) target = $region36
        $region35: #{tpu_custom_call.1} parent=27 // pred_region
          %161 = dma.done %s154, 1024
        $region36: #{tpu_custom_call.1} parent=27 // pred_fallthru
          _
        %p162 = pneg %p36
        %p163 = pneg %p33
        %s164 = sand.u32 %s49, 1
        %s165 = scalar_lea.sflag [#allocation8], %s164
        %s166 = sand.u32 %s49, 1
        %s167 = smul.addr %s166, 64
        %s168 = scalar_lea.vmem [#allocation7], %s167
        %p169 = pneg %p62
        %p170 = pneg %p59
        %p171 = pneg %p88
        %p172 = pneg %p85
        %s173 = sand.u32 %s75, 1
        %s174 = scalar_lea.sflag [#allocation6], %s173
        %s175 = sand.u32 %s75, 1
        %s176 = smul.addr %s175, 64
        %s177 = scalar_lea.vmem [#allocation9], %s176
        %s178 = smul.u32 4, %s20
        %s179 = smul.u32 4, %s20
        %vm180 = vcmask 130048
        %181 = vst.msk [vmem:[#allocation2] sm:$0xff] %vm180, 0.0
        %182 = vst.msk [vmem:[#allocation2 + $0x20] sm:$0xff] %vm180, 0.0
        %183 = vst.msk [vmem:[#allocation2 + $0x40] sm:$0xff] %vm180, 0.0
        %184 = vst.msk [vmem:[#allocation2 + $0x60] sm:$0xff] %vm180, 0.0
        %vm185 = vcmask 125952
        %186 = vst.msk [vmem:[#allocation2 + $0x18] sm:$0xf] %vm185, 0.0
        %187 = vst.msk [vmem:[#allocation2 + $0x38] sm:$0xf] %vm185, 0.0
        %188 = vst.msk [vmem:[#allocation2 + $0x58] sm:$0xf] %vm185, 0.0
        %189 = vst.msk [vmem:[#allocation2 + $0x78] sm:$0xf] %vm185, 0.0
        %v190 = vld [vmem:[%s157] sm:$0xff]
        %v191 = vld [vmem:[%s157 + $0x8] sm:$0xff]
        %v192 = vld [vmem:[%s157 + $0x10] sm:$0xff]
        %v193 = vld [vmem:[%s157 + $0x18] sm:$0xff]
        %v194 = vld [vmem:[%s157 + $0x20] sm:$0xff]
        %v195 = vld [vmem:[%s157 + $0x28] sm:$0xff]
        %v196 = vld [vmem:[%s157 + $0x30] sm:$0xff]
        %v197 = vld [vmem:[%s157 + $0x38] sm:$0xff]
        %198 = vst.msk [vmem:[#allocation2 + $0x8] sm:$0xff] %vm180, %v190
        %199 = vst.msk [vmem:[#allocation2 + $0x10] sm:$0xff] %vm180, %v191
        %200 = vst.msk [vmem:[#allocation2 + $0x28] sm:$0xff] %vm180, %v192
        %201 = vst.msk [vmem:[#allocation2 + $0x30] sm:$0xff] %vm180, %v193
        %202 = vst.msk [vmem:[#allocation2 + $0x48] sm:$0xff] %vm180, %v194
        %203 = vst.msk [vmem:[#allocation2 + $0x50] sm:$0xff] %vm180, %v195
        %204 = vst.msk [vmem:[#allocation2 + $0x68] sm:$0xff] %vm180, %v196
        %205 = vst.msk [vmem:[#allocation2 + $0x70] sm:$0xff] %vm180, %v197
        %v206 = vld [vmem:[#allocation2 + $0x4] sm:$0xff]
        %v207 = vld [vmem:[#allocation2 + $0xc] sm:$0xff]
        %v208 = vld [vmem:[#allocation2 + $0x24] sm:$0xff]
        %v209 = vld [vmem:[#allocation2 + $0x2c] sm:$0xff]
        %v210 = vld [vmem:[#allocation2 + $0x44] sm:$0xff]
        %v211 = vld [vmem:[#allocation2 + $0x4c] sm:$0xff]
        %v212 = vld [vmem:[#allocation2 + $0x64] sm:$0xff]
        %v213 = vld [vmem:[#allocation2 + $0x6c] sm:$0xff]
        %v214 = vld [vmem:[#allocation4] sm:$0xff]
        %v215 = vld [vmem:[#allocation4 + $0x8] sm:$0xff]
        %v217 = vsel %vm180, %v206, 0
        %v220 = vsel %vm180, %v207, 0
        %v223 = vsel %vm180, %v208, 0
        %v226 = vsel %vm180, %v209, 0
        %v229 = vsel %vm180, %v210, 0
        %v232 = vsel %vm180, %v211, 0
        %v235 = vsel %vm180, %v212, 0
        %v238 = vsel %vm180, %v213, 0
        %240 = vmatprep.subr.mxu0 0.0
        %241 = vmatpush1.msra.mxu0 %v214
        %242 = vmatprep.subr.mxu0 0.0
        %243 = vmatpush1.msra.mxu0 %v215
        %244 = vmatprep.subr.mxu0 0.0
        %245 = vmatpush1.msra.mxu0 0.0
        %246 = vmatprep.subr.mxu0 0.0
        %247 = vmatpush1.msra.mxu0 0.0
        %248 = vmatprep.subr.mxu0 0.0
        %249 = vmatpush1.msra.mxu0 0.0
        %250 = vmatprep.subr.mxu0 0.0
        %251 = vmatpush1.msra.mxu0 0.0
        %252 = vmatprep.subr.mxu0 0.0
        %253 = vmatpush1.msra.mxu0 0.0
        %254 = vmatprep.subr.mxu0 0.0
        %255 = vmatpush1.msra.mxu0 0.0
        %256 = vmatprep.subr.mxu0 0.0
        %257 = vmatpush1.msra.mxu0 0.0
        %258 = vmatprep.subr.mxu0 0.0
        %259 = vmatpush1.msra.mxu0 0.0
        %260 = vmatprep.subr.mxu0 0.0
        %261 = vmatpush1.msra.mxu0 0.0
        %262 = vmatprep.subr.mxu0 0.0
        %263 = vmatpush1.msra.mxu0 0.0
        %264 = vmatprep.subr.mxu0 0.0
        %265 = vmatpush1.msra.mxu0 0.0
        %266 = vmatprep.subr.mxu0 0.0
        %267 = vmatpush1.msra.mxu0 0.0
        %268 = vmatprep.subr.mxu0 0.0
        %269 = vmatpush1.msra.mxu0 0.0
        %270 = vmatprep.subr.mxu0 0.0
        %271 = vmatpush1.msra.mxu0 0.0
        %272 = vmatprep.subr.mxu0 0.0
        %273 = vmatpush1.msra.mxu0 0.0
        %274 = vmatprep.subr.mxu0 0.0
        %275 = vmatpush1.msra.mxu0 0.0
        %276 = vmatprep.subr.mxu0 0.0
        %277 = vmatpush1.msra.mxu0 0.0
        %278 = vmatprep.subr.mxu0 0.0
        %279 = vmatpush1.msra.mxu0 0.0
        %280 = vmatprep.subr.mxu0 0.0
        %281 = vmatpush1.msra.mxu0 0.0
        %282 = vmatprep.subr.mxu0 0.0
        %283 = vmatpush1.msra.mxu0 0.0
        %284 = vmatprep.subr.mxu0 0.0
        %285 = vmatpush1.msra.mxu0 0.0
        %286 = vmatprep.subr.mxu0 0.0
        %287 = vmatpush1.msra.mxu0 0.0
        %288 = vmatprep.subr.mxu0 0.0
        %289 = vmatpush1.msra.mxu0 0.0
        %290 = vmatprep.subr.mxu0 0.0
        %291 = vmatpush1.msra.mxu0 0.0
        %292 = vmatprep.subr.mxu0 0.0
        %293 = vmatpush1.msra.mxu0 0.0
        %294 = vmatprep.subr.mxu0 0.0
        %295 = vmatpush1.msra.mxu0 0.0
        %296 = vmatprep.subr.mxu0 0.0
        %297 = vmatpush1.msra.mxu0 0.0
        %298 = vmatprep.subr.mxu0 0.0
        %299 = vmatpush1.msra.mxu0 0.0
        %300 = vmatprep.subr.mxu0 0.0
        %301 = vmatpush1.msra.mxu0 0.0
        %302 = vmatprep.subr.mxu0 0.0
        %303 = vmatpush1.msra.mxu0 0.0
        %304 = vmatprep.mubr.f32.mxu0 0.0
        %305 = vmatmul.mubr.f32.gmra.mrb[0].mxu0 %v217
        %v306 = vpop.f32.mrb[0].mxu0
        %v307 = vadd.f32 0.0, %v306
        %v308 = vpop.f32.mrb[0].mxu0
        %309 = vmatprep.mubr.f32.mxu0 0.0
        %310 = vmatmul.mubr.f32.gmra.mrb[0].mxu0 %v220
        %v311 = vpop.f32.mrb[0].mxu0
        %v312 = vadd.f32 0.0, %v311
        %v313 = vpop.f32.mrb[0].mxu0
        %314 = vmatprep.mubr.f32.mxu0 0.0
        %315 = vmatmul.mubr.f32.gmra.mrb[0].mxu0 %v223
        %v316 = vpop.f32.mrb[0].mxu0
        %v317 = vadd.f32 0.0, %v316
        %v318 = vpop.f32.mrb[0].mxu0
        %319 = vmatprep.mubr.f32.mxu0 0.0
        %320 = vmatmul.mubr.f32.gmra.mrb[0].mxu0 %v226
        %v321 = vpop.f32.mrb[0].mxu0
        %v322 = vadd.f32 0.0, %v321
        %v323 = vpop.f32.mrb[0].mxu0
        %324 = vmatprep.mubr.f32.mxu0 0.0
        %325 = vmatmul.mubr.f32.gmra.mrb[0].mxu0 %v229
        %v326 = vpop.f32.mrb[0].mxu0
        %v327 = vadd.f32 0.0, %v326
        %v328 = vpop.f32.mrb[0].mxu0
        %329 = vmatprep.mubr.f32.mxu0 0.0
        %330 = vmatmul.mubr.f32.gmra.mrb[0].mxu0 %v232
        %v331 = vpop.f32.mrb[0].mxu0
        %v332 = vadd.f32 0.0, %v331
        %v333 = vpop.f32.mrb[0].mxu0
        %334 = vmatprep.mubr.f32.mxu0 0.0
        %335 = vmatmul.mubr.f32.gmra.mrb[0].mxu0 %v235
        %v336 = vpop.f32.mrb[0].mxu0
        %v337 = vadd.f32 0.0, %v336
        %v338 = vpop.f32.mrb[0].mxu0
        %339 = vmatprep.mubr.f32.mxu0 0.0
        %340 = vmatmul.mubr.f32.gmra.mrb[0].mxu0 %v238
        %v341 = vpop.f32.mrb[0].mxu0
        %v342 = vadd.f32 0.0, %v341
        %v343 = vpop.f32.mrb[0].mxu0
        %344 = vdwg.mxu0
        %345 = vst.msk [vmem:[#allocation3] sm:$0xff] %vm180, %v307
        %346 = vst.msk [vmem:[#allocation3 + $0x8] sm:$0xff] %vm180, %v312
        %347 = vst.msk [vmem:[#allocation3 + $0x10] sm:$0xff] %vm180, %v317
        %348 = vst.msk [vmem:[#allocation3 + $0x18] sm:$0xff] %vm180, %v322
        %349 = vst.msk [vmem:[#allocation3 + $0x20] sm:$0xff] %vm180, %v327
        %350 = vst.msk [vmem:[#allocation3 + $0x28] sm:$0xff] %vm180, %v332
        %351 = vst.msk [vmem:[#allocation3 + $0x30] sm:$0xff] %vm180, %v337
        %352 = vst.msk [vmem:[#allocation3 + $0x38] sm:$0xff] %vm180, %v342
        %v353 = vld [vmem:[#allocation2 + $0x5] sm:$0xff]
        %v354 = vld [vmem:[#allocation2 + $0xd] sm:$0xff]
        %v355 = vld [vmem:[#allocation2 + $0x25] sm:$0xff]
        %v356 = vld [vmem:[#allocation2 + $0x2d] sm:$0xff]
        %v357 = vld [vmem:[#allocation2 + $0x45] sm:$0xff]
        %v358 = vld [vmem:[#allocation2 + $0x4d] sm:$0xff]
        %v359 = vld [vmem:[#allocation2 + $0x65] sm:$0xff]
        %v360 = vld [vmem:[#allocation2 + $0x6d] sm:$0xff]
        %s361 = scalar_lea.vmem [#allocation4], 16
        %v362 = vld [vmem:[%s361] sm:$0xff]
        %v363 = vld [vmem:[%s361 + $0x8] sm:$0xff]
        %v365 = vsel %vm180, %v353, 0
        %v368 = vsel %vm180, %v354, 0
        %v371 = vsel %vm180, %v355, 0
        %v374 = vsel %vm180, %v356, 0
        %v377 = vsel %vm180, %v357, 0
        %v380 = vsel %vm180, %v358, 0
        %v383 = vsel %vm180, %v359, 0
        %v386 = vsel %vm180, %v360, 0
        %388 = vmatprep.subr.mxu0 0.0
        %389 = vmatpush1.msra.mxu0 %v362
        %390 = vmatprep.subr.mxu0 0.0
        %391 = vmatpush1.msra.mxu0 %v363
        %392 = vmatprep.subr.mxu0 0.0
        %393 = vmatpush1.msra.mxu0 0.0
        %394 = vmatprep.subr.mxu0 0.0
        %395 = vmatpush1.msra.mxu0 0.0
        %396 = vmatprep.subr.mxu0 0.0
        %397 = vmatpush1.msra.mxu0 0.0
        %398 = vmatprep.subr.mxu0 0.0
        %399 = vmatpush1.msra.mxu0 0.0
        %400 = vmatprep.subr.mxu0 0.0
        %401 = vmatpush1.msra.mxu0 0.0
        %402 = vmatprep.subr.mxu0 0.0
        %403 = vmatpush1.msra.mxu0 0.0
        %404 = vmatprep.subr.mxu0 0.0
        %405 = vmatpush1.msra.mxu0 0.0
        %406 = vmatprep.subr.mxu0 0.0
        %407 = vmatpush1.msra.mxu0 0.0
        %408 = vmatprep.subr.mxu0 0.0
        %409 = vmatpush1.msra.mxu0 0.0
        %410 = vmatprep.subr.mxu0 0.0
        %411 = vmatpush1.msra.mxu0 0.0
        %412 = vmatprep.subr.mxu0 0.0
        %413 = vmatpush1.msra.mxu0 0.0
        %414 = vmatprep.subr.mxu0 0.0
        %415 = vmatpush1.msra.mxu0 0.0
        %416 = vmatprep.subr.mxu0 0.0
        %417 = vmatpush1.msra.mxu0 0.0
        %418 = vmatprep.subr.mxu0 0.0
        %419 = vmatpush1.msra.mxu0 0.0
        %420 = vmatprep.subr.mxu0 0.0
        %421 = vmatpush1.msra.mxu0 0.0
        %422 = vmatprep.subr.mxu0 0.0
        %423 = vmatpush1.msra.mxu0 0.0
        %424 = vmatprep.subr.mxu0 0.0
        %425 = vmatpush1.msra.mxu0 0.0
        %426 = vmatprep.subr.mxu0 0.0
        %427 = vmatpush1.msra.mxu0 0.0
        %428 = vmatprep.subr.mxu0 0.0
        %429 = vmatpush1.msra.mxu0 0.0
        %430 = vmatprep.subr.mxu0 0.0
        %431 = vmatpush1.msra.mxu0 0.0
        %432 = vmatprep.subr.mxu0 0.0
        %433 = vmatpush1.msra.mxu0 0.0
        %434 = vmatprep.subr.mxu0 0.0
        %435 = vmatpush1.msra.mxu0 0.0
        %436 = vmatprep.subr.mxu0 0.0
        %437 = vmatpush1.msra.mxu0 0.0
        %438 = vmatprep.subr.mxu0 0.0
        %439 = vmatpush1.msra.mxu0 0.0
        %440 = vmatprep.subr.mxu0 0.0
        %441 = vmatpush1.msra.mxu0 0.0
        %442 = vmatprep.subr.mxu0 0.0
        %443 = vmatpush1.msra.mxu0 0.0
        %444 = vmatprep.subr.mxu0 0.0
        %445 = vmatpush1.msra.mxu0 0.0
        %446 = vmatprep.subr.mxu0 0.0
        %447 = vmatpush1.msra.mxu0 0.0
        %448 = vmatprep.subr.mxu0 0.0
        %449 = vmatpush1.msra.mxu0 0.0
        %450 = vmatprep.subr.mxu0 0.0
        %451 = vmatpush1.msra.mxu0 0.0
        %452 = vmatprep.mubr.f32.mxu0 0.0
        %453 = vmatmul.mubr.f32.gmra.mrb[0].mxu0 %v365
        %v454 = vpop.f32.mrb[0].mxu0
        %v455 = vadd.f32 0.0, %v454
        %v456 = vpop.f32.mrb[0].mxu0
        %457 = vmatprep.mubr.f32.mxu0 0.0
        %458 = vmatmul.mubr.f32.gmra.mrb[0].mxu0 %v368
        %v459 = vpop.f32.mrb[0].mxu0
        %v460 = vadd.f32 0.0, %v459
        %v461 = vpop.f32.mrb[0].mxu0
        %462 = vmatprep.mubr.f32.mxu0 0.0
        %463 = vmatmul.mubr.f32.gmra.mrb[0].mxu0 %v371
        %v464 = vpop.f32.mrb[0].mxu0
        %v465 = vadd.f32 0.0, %v464
        %v466 = vpop.f32.mrb[0].mxu0
        %467 = vmatprep.mubr.f32.mxu0 0.0
        %468 = vmatmul.mubr.f32.gmra.mrb[0].mxu0 %v374
        %v469 = vpop.f32.mrb[0].mxu0
        %v470 = vadd.f32 0.0, %v469
        %v471 = vpop.f32.mrb[0].mxu0
        %472 = vmatprep.mubr.f32.mxu0 0.0
        %473 = vmatmul.mubr.f32.gmra.mrb[0].mxu0 %v377
        %v474 = vpop.f32.mrb[0].mxu0
        %v475 = vadd.f32 0.0, %v474
        %v476 = vpop.f32.mrb[0].mxu0
        %477 = vmatprep.mubr.f32.mxu0 0.0
        %478 = vmatmul.mubr.f32.gmra.mrb[0].mxu0 %v380
        %v479 = vpop.f32.mrb[0].mxu0
        %v480 = vadd.f32 0.0, %v479
        %v481 = vpop.f32.mrb[0].mxu0
        %482 = vmatprep.mubr.f32.mxu0 0.0
        %483 = vmatmul.mubr.f32.gmra.mrb[0].mxu0 %v383
        %v484 = vpop.f32.mrb[0].mxu0
        %v485 = vadd.f32 0.0, %v484
        %v486 = vpop.f32.mrb[0].mxu0
        %487 = vmatprep.mubr.f32.mxu0 0.0
        %488 = vmatmul.mubr.f32.gmra.mrb[0].mxu0 %v386
        %v489 = vpop.f32.mrb[0].mxu0
        %v490 = vadd.f32 0.0, %v489
        %v491 = vpop.f32.mrb[0].mxu0
        %492 = vdwg.mxu0
        %v493 = vld [vmem:[#allocation3] sm:$0xff]
        %v494 = vld [vmem:[#allocation3 + $0x8] sm:$0xff]
        %v495 = vld [vmem:[#allocation3 + $0x10] sm:$0xff]
        %v496 = vld [vmem:[#allocation3 + $0x18] sm:$0xff]
        %v497 = vld [vmem:[#allocation3 + $0x20] sm:$0xff]
        %v498 = vld [vmem:[#allocation3 + $0x28] sm:$0xff]
        %v499 = vld [vmem:[#allocation3 + $0x30] sm:$0xff]
        %v500 = vld [vmem:[#allocation3 + $0x38] sm:$0xff]
        %v501 = vadd.f32 %v493, %v455
        %v502 = vadd.f32 %v494, %v460
        %v503 = vadd.f32 %v495, %v465
        %v504 = vadd.f32 %v496, %v470
        %v505 = vadd.f32 %v497, %v475
        %v506 = vadd.f32 %v498, %v480
        %v507 = vadd.f32 %v499, %v485
        %v508 = vadd.f32 %v500, %v490
        %509 = vst.msk [vmem:[#allocation3] sm:$0xff] %vm180, %v501
        %510 = vst.msk [vmem:[#allocation3 + $0x8] sm:$0xff] %vm180, %v502
        %511 = vst.msk [vmem:[#allocation3 + $0x10] sm:$0xff] %vm180, %v503
        %512 = vst.msk [vmem:[#allocation3 + $0x18] sm:$0xff] %vm180, %v504
        %513 = vst.msk [vmem:[#allocation3 + $0x20] sm:$0xff] %vm180, %v505
        %514 = vst.msk [vmem:[#allocation3 + $0x28] sm:$0xff] %vm180, %v506
        %515 = vst.msk [vmem:[#allocation3 + $0x30] sm:$0xff] %vm180, %v507
        %516 = vst.msk [vmem:[#allocation3 + $0x38] sm:$0xff] %vm180, %v508
        %v517 = vld [vmem:[#allocation2 + $0x6] sm:$0xff]
        %v518 = vld [vmem:[#allocation2 + $0xe] sm:$0xff]
        %v519 = vld [vmem:[#allocation2 + $0x26] sm:$0xff]
        %v520 = vld [vmem:[#allocation2 + $0x2e] sm:$0xff]
        %v521 = vld [vmem:[#allocation2 + $0x46] sm:$0xff]
        %v522 = vld [vmem:[#allocation2 + $0x4e] sm:$0xff]
        %v523 = vld [vmem:[#allocation2 + $0x66] sm:$0xff]
        %v524 = vld [vmem:[#allocation2 + $0x6e] sm:$0xff]
        %s525 = scalar_lea.vmem [#allocation4], 32
        %v526 = vld [vmem:[%s525] sm:$0xff]
        %v527 = vld [vmem:[%s525 + $0x8] sm:$0xff]
        %v529 = vsel %vm180, %v517, 0
        %v532 = vsel %vm180, %v518, 0
        %v535 = vsel %vm180, %v519, 0
        %v538 = vsel %vm180, %v520, 0
        %v541 = vsel %vm180, %v521, 0
        %v544 = vsel %vm180, %v522, 0
        %v547 = vsel %vm180, %v523, 0
        %v550 = vsel %vm180, %v524, 0
        %552 = vmatprep.subr.mxu0 0.0
        %553 = vmatpush1.msra.mxu0 %v526
        %554 = vmatprep.subr.mxu0 0.0
        %555 = vmatpush1.msra.mxu0 %v527
        %556 = vmatprep.subr.mxu0 0.0
        %557 = vmatpush1.msra.mxu0 0.0
        %558 = vmatprep.subr.mxu0 0.0
        %559 = vmatpush1.msra.mxu0 0.0
        %560 = vmatprep.subr.mxu0 0.0
        %561 = vmatpush1.msra.mxu0 0.0
        %562 = vmatprep.subr.mxu0 0.0
        %563 = vmatpush1.msra.mxu0 0.0
        %564 = vmatprep.subr.mxu0 0.0
        %565 = vmatpush1.msra.mxu0 0.0
        %566 = vmatprep.subr.mxu0 0.0
        %567 = vmatpush1.msra.mxu0 0.0
        %568 = vmatprep.subr.mxu0 0.0
        %569 = vmatpush1.msra.mxu0 0.0
        %570 = vmatprep.subr.mxu0 0.0
        %571 = vmatpush1.msra.mxu0 0.0
        %572 = vmatprep.subr.mxu0 0.0
        %573 = vmatpush1.msra.mxu0 0.0
        %574 = vmatprep.subr.mxu0 0.0
        %575 = vmatpush1.msra.mxu0 0.0
        %576 = vmatprep.subr.mxu0 0.0
        %577 = vmatpush1.msra.mxu0 0.0
        %578 = vmatprep.subr.mxu0 0.0
        %579 = vmatpush1.msra.mxu0 0.0
        %580 = vmatprep.subr.mxu0 0.0
        %581 = vmatpush1.msra.mxu0 0.0
        %582 = vmatprep.subr.mxu0 0.0
        %583 = vmatpush1.msra.mxu0 0.0
        %584 = vmatprep.subr.mxu0 0.0
        %585 = vmatpush1.msra.mxu0 0.0
        %586 = vmatprep.subr.mxu0 0.0
        %587 = vmatpush1.msra.mxu0 0.0
        %588 = vmatprep.subr.mxu0 0.0
        %589 = vmatpush1.msra.mxu0 0.0
        %590 = vmatprep.subr.mxu0 0.0
        %591 = vmatpush1.msra.mxu0 0.0
        %592 = vmatprep.subr.mxu0 0.0
        %593 = vmatpush1.msra.mxu0 0.0
        %594 = vmatprep.subr.mxu0 0.0
        %595 = vmatpush1.msra.mxu0 0.0
        %596 = vmatprep.subr.mxu0 0.0
        %597 = vmatpush1.msra.mxu0 0.0
        %598 = vmatprep.subr.mxu0 0.0
        %599 = vmatpush1.msra.mxu0 0.0
        %600 = vmatprep.subr.mxu0 0.0
        %601 = vmatpush1.msra.mxu0 0.0
        %602 = vmatprep.subr.mxu0 0.0
        %603 = vmatpush1.msra.mxu0 0.0
        %604 = vmatprep.subr.mxu0 0.0
        %605 = vmatpush1.msra.mxu0 0.0
        %606 = vmatprep.subr.mxu0 0.0
        %607 = vmatpush1.msra.mxu0 0.0
        %608 = vmatprep.subr.mxu0 0.0
        %609 = vmatpush1.msra.mxu0 0.0
        %610 = vmatprep.subr.mxu0 0.0
        %611 = vmatpush1.msra.mxu0 0.0
        %612 = vmatprep.subr.mxu0 0.0
        %613 = vmatpush1.msra.mxu0 0.0
        %614 = vmatprep.subr.mxu0 0.0
        %615 = vmatpush1.msra.mxu0 0.0
        %616 = vmatprep.mubr.f32.mxu0 0.0
        %617 = vmatmul.mubr.f32.gmra.mrb[0].mxu0 %v529
        %v618 = vpop.f32.mrb[0].mxu0
        %v619 = vadd.f32 0.0, %v618
        %v620 = vpop.f32.mrb[0].mxu0
        %621 = vmatprep.mubr.f32.mxu0 0.0
        %622 = vmatmul.mubr.f32.gmra.mrb[0].mxu0 %v532
        %v623 = vpop.f32.mrb[0].mxu0
        %v624 = vadd.f32 0.0, %v623
        %v625 = vpop.f32.mrb[0].mxu0
        %626 = vmatprep.mubr.f32.mxu0 0.0
        %627 = vmatmul.mubr.f32.gmra.mrb[0].mxu0 %v535
        %v628 = vpop.f32.mrb[0].mxu0
        %v629 = vadd.f32 0.0, %v628
        %v630 = vpop.f32.mrb[0].mxu0
        %631 = vmatprep.mubr.f32.mxu0 0.0
        %632 = vmatmul.mubr.f32.gmra.mrb[0].mxu0 %v538
        %v633 = vpop.f32.mrb[0].mxu0
        %v634 = vadd.f32 0.0, %v633
        %v635 = vpop.f32.mrb[0].mxu0
        %636 = vmatprep.mubr.f32.mxu0 0.0
        %637 = vmatmul.mubr.f32.gmra.mrb[0].mxu0 %v541
        %v638 = vpop.f32.mrb[0].mxu0
        %v639 = vadd.f32 0.0, %v638
        %v640 = vpop.f32.mrb[0].mxu0
        %641 = vmatprep.mubr.f32.mxu0 0.0
        %642 = vmatmul.mubr.f32.gmra.mrb[0].mxu0 %v544
        %v643 = vpop.f32.mrb[0].mxu0
        %v644 = vadd.f32 0.0, %v643
        %v645 = vpop.f32.mrb[0].mxu0
        %646 = vmatprep.mubr.f32.mxu0 0.0
        %647 = vmatmul.mubr.f32.gmra.mrb[0].mxu0 %v547
        %v648 = vpop.f32.mrb[0].mxu0
        %v649 = vadd.f32 0.0, %v648
        %v650 = vpop.f32.mrb[0].mxu0
        %651 = vmatprep.mubr.f32.mxu0 0.0
        %652 = vmatmul.mubr.f32.gmra.mrb[0].mxu0 %v550
        %v653 = vpop.f32.mrb[0].mxu0
        %v654 = vadd.f32 0.0, %v653
        %v655 = vpop.f32.mrb[0].mxu0
        %656 = vdwg.mxu0
        %v657 = vld [vmem:[#allocation3] sm:$0xff]
        %v658 = vld [vmem:[#allocation3 + $0x8] sm:$0xff]
        %v659 = vld [vmem:[#allocation3 + $0x10] sm:$0xff]
        %v660 = vld [vmem:[#allocation3 + $0x18] sm:$0xff]
        %v661 = vld [vmem:[#allocation3 + $0x20] sm:$0xff]
        %v662 = vld [vmem:[#allocation3 + $0x28] sm:$0xff]
        %v663 = vld [vmem:[#allocation3 + $0x30] sm:$0xff]
        %v664 = vld [vmem:[#allocation3 + $0x38] sm:$0xff]
        %v665 = vadd.f32 %v657, %v619
        %v666 = vadd.f32 %v658, %v624
        %v667 = vadd.f32 %v659, %v629
        %v668 = vadd.f32 %v660, %v634
        %v669 = vadd.f32 %v661, %v639
        %v670 = vadd.f32 %v662, %v644
        %v671 = vadd.f32 %v663, %v649
        %v672 = vadd.f32 %v664, %v654
        %673 = vst.msk [vmem:[#allocation3] sm:$0xff] %vm180, %v665
        %674 = vst.msk [vmem:[#allocation3 + $0x8] sm:$0xff] %vm180, %v666
        %675 = vst.msk [vmem:[#allocation3 + $0x10] sm:$0xff] %vm180, %v667
        %676 = vst.msk [vmem:[#allocation3 + $0x18] sm:$0xff] %vm180, %v668
        %677 = vst.msk [vmem:[#allocation3 + $0x20] sm:$0xff] %vm180, %v669
        %678 = vst.msk [vmem:[#allocation3 + $0x28] sm:$0xff] %vm180, %v670
        %679 = vst.msk [vmem:[#allocation3 + $0x30] sm:$0xff] %vm180, %v671
        %680 = vst.msk [vmem:[#allocation3 + $0x38] sm:$0xff] %vm180, %v672
        %v681 = vld [vmem:[#allocation2 + $0x7] sm:$0xff]
        %v682 = vld [vmem:[#allocation2 + $0xf] sm:$0xff]
        %v683 = vld [vmem:[#allocation2 + $0x27] sm:$0xff]
        %v684 = vld [vmem:[#allocation2 + $0x2f] sm:$0xff]
        %v685 = vld [vmem:[#allocation2 + $0x47] sm:$0xff]
        %v686 = vld [vmem:[#allocation2 + $0x4f] sm:$0xff]
        %v687 = vld [vmem:[#allocation2 + $0x67] sm:$0xff]
        %v688 = vld [vmem:[#allocation2 + $0x6f] sm:$0xff]
        %s689 = scalar_lea.vmem [#allocation4], 48
        %v690 = vld [vmem:[%s689] sm:$0xff]
        %v691 = vld [vmem:[%s689 + $0x8] sm:$0xff]
        %v693 = vsel %vm180, %v681, 0
        %v696 = vsel %vm180, %v682, 0
        %v699 = vsel %vm180, %v683, 0
        %v702 = vsel %vm180, %v684, 0
        %v705 = vsel %vm180, %v685, 0
        %v708 = vsel %vm180, %v686, 0
        %v711 = vsel %vm180, %v687, 0
        %v714 = vsel %vm180, %v688, 0
        %716 = vmatprep.subr.mxu0 0.0
        %717 = vmatpush1.msra.mxu0 %v690
        %718 = vmatprep.subr.mxu0 0.0
        %719 = vmatpush1.msra.mxu0 %v691
        %720 = vmatprep.subr.mxu0 0.0
        %721 = vmatpush1.msra.mxu0 0.0
        %722 = vmatprep.subr.mxu0 0.0
        %723 = vmatpush1.msra.mxu0 0.0
        %724 = vmatprep.subr.mxu0 0.0
        %725 = vmatpush1.msra.mxu0 0.0
        %726 = vmatprep.subr.mxu0 0.0
        %727 = vmatpush1.msra.mxu0 0.0
        %728 = vmatprep.subr.mxu0 0.0
        %729 = vmatpush1.msra.mxu0 0.0
        %730 = vmatprep.subr.mxu0 0.0
        %731 = vmatpush1.msra.mxu0 0.0
        %732 = vmatprep.subr.mxu0 0.0
        %733 = vmatpush1.msra.mxu0 0.0
        %734 = vmatprep.subr.mxu0 0.0
        %735 = vmatpush1.msra.mxu0 0.0
        %736 = vmatprep.subr.mxu0 0.0
        %737 = vmatpush1.msra.mxu0 0.0
        %738 = vmatprep.subr.mxu0 0.0
        %739 = vmatpush1.msra.mxu0 0.0
        %740 = vmatprep.subr.mxu0 0.0
        %741 = vmatpush1.msra.mxu0 0.0
        %742 = vmatprep.subr.mxu0 0.0
        %743 = vmatpush1.msra.mxu0 0.0
        %744 = vmatprep.subr.mxu0 0.0
        %745 = vmatpush1.msra.mxu0 0.0
        %746 = vmatprep.subr.mxu0 0.0
        %747 = vmatpush1.msra.mxu0 0.0
        %748 = vmatprep.subr.mxu0 0.0
        %749 = vmatpush1.msra.mxu0 0.0
        %750 = vmatprep.subr.mxu0 0.0
        %751 = vmatpush1.msra.mxu0 0.0
        %752 = vmatprep.subr.mxu0 0.0
        %753 = vmatpush1.msra.mxu0 0.0
        %754 = vmatprep.subr.mxu0 0.0
        %755 = vmatpush1.msra.mxu0 0.0
        %756 = vmatprep.subr.mxu0 0.0
        %757 = vmatpush1.msra.mxu0 0.0
        %758 = vmatprep.subr.mxu0 0.0
        %759 = vmatpush1.msra.mxu0 0.0
        %760 = vmatprep.subr.mxu0 0.0
        %761 = vmatpush1.msra.mxu0 0.0
        %762 = vmatprep.subr.mxu0 0.0
        %763 = vmatpush1.msra.mxu0 0.0
        %764 = vmatprep.subr.mxu0 0.0
        %765 = vmatpush1.msra.mxu0 0.0
        %766 = vmatprep.subr.mxu0 0.0
        %767 = vmatpush1.msra.mxu0 0.0
        %768 = vmatprep.subr.mxu0 0.0
        %769 = vmatpush1.msra.mxu0 0.0
        %770 = vmatprep.subr.mxu0 0.0
        %771 = vmatpush1.msra.mxu0 0.0
        %772 = vmatprep.subr.mxu0 0.0
        %773 = vmatpush1.msra.mxu0 0.0
        %774 = vmatprep.subr.mxu0 0.0
        %775 = vmatpush1.msra.mxu0 0.0
        %776 = vmatprep.subr.mxu0 0.0
        %777 = vmatpush1.msra.mxu0 0.0
        %778 = vmatprep.subr.mxu0 0.0
        %779 = vmatpush1.msra.mxu0 0.0
        %780 = vmatprep.mubr.f32.mxu0 0.0
        %781 = vmatmul.mubr.f32.gmra.mrb[0].mxu0 %v693
        %v782 = vpop.f32.mrb[0].mxu0
        %v783 = vadd.f32 0.0, %v782
        %v784 = vpop.f32.mrb[0].mxu0
        %785 = vmatprep.mubr.f32.mxu0 0.0
        %786 = vmatmul.mubr.f32.gmra.mrb[0].mxu0 %v696
        %v787 = vpop.f32.mrb[0].mxu0
        %v788 = vadd.f32 0.0, %v787
        %v789 = vpop.f32.mrb[0].mxu0
        %790 = vmatprep.mubr.f32.mxu0 0.0
        %791 = vmatmul.mubr.f32.gmra.mrb[0].mxu0 %v699
        %v792 = vpop.f32.mrb[0].mxu0
        %v793 = vadd.f32 0.0, %v792
        %v794 = vpop.f32.mrb[0].mxu0
        %795 = vmatprep.mubr.f32.mxu0 0.0
        %796 = vmatmul.mubr.f32.gmra.mrb[0].mxu0 %v702
        %v797 = vpop.f32.mrb[0].mxu0
        %v798 = vadd.f32 0.0, %v797
        %v799 = vpop.f32.mrb[0].mxu0
        %800 = vmatprep.mubr.f32.mxu0 0.0
        %801 = vmatmul.mubr.f32.gmra.mrb[0].mxu0 %v705
        %v802 = vpop.f32.mrb[0].mxu0
        %v803 = vadd.f32 0.0, %v802
        %v804 = vpop.f32.mrb[0].mxu0
        %805 = vmatprep.mubr.f32.mxu0 0.0
        %806 = vmatmul.mubr.f32.gmra.mrb[0].mxu0 %v708
        %v807 = vpop.f32.mrb[0].mxu0
        %v808 = vadd.f32 0.0, %v807
        %v809 = vpop.f32.mrb[0].mxu0
        %810 = vmatprep.mubr.f32.mxu0 0.0
        %811 = vmatmul.mubr.f32.gmra.mrb[0].mxu0 %v711
        %v812 = vpop.f32.mrb[0].mxu0
        %v813 = vadd.f32 0.0, %v812
        %v814 = vpop.f32.mrb[0].mxu0
        %815 = vmatprep.mubr.f32.mxu0 0.0
        %816 = vmatmul.mubr.f32.gmra.mrb[0].mxu0 %v714
        %v817 = vpop.f32.mrb[0].mxu0
        %v818 = vadd.f32 0.0, %v817
        %v819 = vpop.f32.mrb[0].mxu0
        %820 = vdwg.mxu0
        %v821 = vld [vmem:[#allocation3] sm:$0xff]
        %v822 = vld [vmem:[#allocation3 + $0x8] sm:$0xff]
        %v823 = vld [vmem:[#allocation3 + $0x10] sm:$0xff]
        %v824 = vld [vmem:[#allocation3 + $0x18] sm:$0xff]
        %v825 = vld [vmem:[#allocation3 + $0x20] sm:$0xff]
        %v826 = vld [vmem:[#allocation3 + $0x28] sm:$0xff]
        %v827 = vld [vmem:[#allocation3 + $0x30] sm:$0xff]
        %v828 = vld [vmem:[#allocation3 + $0x38] sm:$0xff]
        %v829 = vadd.f32 %v821, %v783
        %v830 = vadd.f32 %v822, %v788
        %v831 = vadd.f32 %v823, %v793
        %v832 = vadd.f32 %v824, %v798
        %v833 = vadd.f32 %v825, %v803
        %v834 = vadd.f32 %v826, %v808
        %v835 = vadd.f32 %v827, %v813
        %v836 = vadd.f32 %v828, %v818
        %837 = vst.msk [vmem:[#allocation3] sm:$0xff] %vm180, %v829
        %838 = vst.msk [vmem:[#allocation3 + $0x8] sm:$0xff] %vm180, %v830
        %839 = vst.msk [vmem:[#allocation3 + $0x10] sm:$0xff] %vm180, %v831
        %840 = vst.msk [vmem:[#allocation3 + $0x18] sm:$0xff] %vm180, %v832
        %841 = vst.msk [vmem:[#allocation3 + $0x20] sm:$0xff] %vm180, %v833
        %842 = vst.msk [vmem:[#allocation3 + $0x28] sm:$0xff] %vm180, %v834
        %843 = vst.msk [vmem:[#allocation3 + $0x30] sm:$0xff] %vm180, %v835
        %844 = vst.msk [vmem:[#allocation3 + $0x38] sm:$0xff] %vm180, %v836
        %v845 = vld [vmem:[#allocation2 + $0x8] sm:$0xff]
        %v846 = vld [vmem:[#allocation2 + $0x10] sm:$0xff]
        %v847 = vld [vmem:[#allocation2 + $0x28] sm:$0xff]
        %v848 = vld [vmem:[#allocation2 + $0x30] sm:$0xff]
        %v849 = vld [vmem:[#allocation2 + $0x48] sm:$0xff]
        %v850 = vld [vmem:[#allocation2 + $0x50] sm:$0xff]
        %v851 = vld [vmem:[#allocation2 + $0x68] sm:$0xff]
        %v852 = vld [vmem:[#allocation2 + $0x70] sm:$0xff]
        %s853 = scalar_lea.vmem [#allocation4], 64
        %v854 = vld [vmem:[%s853] sm:$0xff]
        %v855 = vld [vmem:[%s853 + $0x8] sm:$0xff]
        %v857 = vsel %vm180, %v845, 0
        %v860 = vsel %vm180, %v846, 0
        %v863 = vsel %vm180, %v847, 0
        %v866 = vsel %vm180, %v848, 0
        %v869 = vsel %vm180, %v849, 0
        %v872 = vsel %vm180, %v850, 0
        %v875 = vsel %vm180, %v851, 0
        %v878 = vsel %vm180, %v852, 0
        %880 = vmatprep.subr.mxu0 0.0
        %881 = vmatpush1.msra.mxu0 %v854
        %882 = vmatprep.subr.mxu0 0.0
        %883 = vmatpush1.msra.mxu0 %v855
        %884 = vmatprep.subr.mxu0 0.0
        %885 = vmatpush1.msra.mxu0 0.0
        %886 = vmatprep.subr.mxu0 0.0
        %887 = vmatpush1.msra.mxu0 0.0
        %888 = vmatprep.subr.mxu0 0.0
        %889 = vmatpush1.msra.mxu0 0.0
        %890 = vmatprep.subr.mxu0 0.0
        %891 = vmatpush1.msra.mxu0 0.0
        %892 = vmatprep.subr.mxu0 0.0
        %893 = vmatpush1.msra.mxu0 0.0
        %894 = vmatprep.subr.mxu0 0.0
        %895 = vmatpush1.msra.mxu0 0.0
        %896 = vmatprep.subr.mxu0 0.0
        %897 = vmatpush1.msra.mxu0 0.0
        %898 = vmatprep.subr.mxu0 0.0
        %899 = vmatpush1.msra.mxu0 0.0
        %900 = vmatprep.subr.mxu0 0.0
        %901 = vmatpush1.msra.mxu0 0.0
        %902 = vmatprep.subr.mxu0 0.0
        %903 = vmatpush1.msra.mxu0 0.0
        %904 = vmatprep.subr.mxu0 0.0
        %905 = vmatpush1.msra.mxu0 0.0
        %906 = vmatprep.subr.mxu0 0.0
        %907 = vmatpush1.msra.mxu0 0.0
        %908 = vmatprep.subr.mxu0 0.0
        %909 = vmatpush1.msra.mxu0 0.0
        %910 = vmatprep.subr.mxu0 0.0
        %911 = vmatpush1.msra.mxu0 0.0
        %912 = vmatprep.subr.mxu0 0.0
        %913 = vmatpush1.msra.mxu0 0.0
        %914 = vmatprep.subr.mxu0 0.0
        %915 = vmatpush1.msra.mxu0 0.0
        %916 = vmatprep.subr.mxu0 0.0
        %917 = vmatpush1.msra.mxu0 0.0
        %918 = vmatprep.subr.mxu0 0.0
        %919 = vmatpush1.msra.mxu0 0.0
        %920 = vmatprep.subr.mxu0 0.0
        %921 = vmatpush1.msra.mxu0 0.0
        %922 = vmatprep.subr.mxu0 0.0
        %923 = vmatpush1.msra.mxu0 0.0
        %924 = vmatprep.subr.mxu0 0.0
        %925 = vmatpush1.msra.mxu0 0.0
        %926 = vmatprep.subr.mxu0 0.0
        %927 = vmatpush1.msra.mxu0 0.0
        %928 = vmatprep.subr.mxu0 0.0
        %929 = vmatpush1.msra.mxu0 0.0
        %930 = vmatprep.subr.mxu0 0.0
        %931 = vmatpush1.msra.mxu0 0.0
        %932 = vmatprep.subr.mxu0 0.0
        %933 = vmatpush1.msra.mxu0 0.0
        %934 = vmatprep.subr.mxu0 0.0
        %935 = vmatpush1.msra.mxu0 0.0
        %936 = vmatprep.subr.mxu0 0.0
        %937 = vmatpush1.msra.mxu0 0.0
        %938 = vmatprep.subr.mxu0 0.0
        %939 = vmatpush1.msra.mxu0 0.0
        %940 = vmatprep.subr.mxu0 0.0
        %941 = vmatpush1.msra.mxu0 0.0
        %942 = vmatprep.subr.mxu0 0.0
        %943 = vmatpush1.msra.mxu0 0.0
        %944 = vmatprep.mubr.f32.mxu0 0.0
        %945 = vmatmul.mubr.f32.gmra.mrb[0].mxu0 %v857
        %v946 = vpop.f32.mrb[0].mxu0
        %v947 = vadd.f32 0.0, %v946
        %v948 = vpop.f32.mrb[0].mxu0
        %949 = vmatprep.mubr.f32.mxu0 0.0
        %950 = vmatmul.mubr.f32.gmra.mrb[0].mxu0 %v860
        %v951 = vpop.f32.mrb[0].mxu0
        %v952 = vadd.f32 0.0, %v951
        %v953 = vpop.f32.mrb[0].mxu0
        %954 = vmatprep.mubr.f32.mxu0 0.0
        %955 = vmatmul.mubr.f32.gmra.mrb[0].mxu0 %v863
        %v956 = vpop.f32.mrb[0].mxu0
        %v957 = vadd.f32 0.0, %v956
        %v958 = vpop.f32.mrb[0].mxu0
        %959 = vmatprep.mubr.f32.mxu0 0.0
        %960 = vmatmul.mubr.f32.gmra.mrb[0].mxu0 %v866
        %v961 = vpop.f32.mrb[0].mxu0
        %v962 = vadd.f32 0.0, %v961
        %v963 = vpop.f32.mrb[0].mxu0
        %964 = vmatprep.mubr.f32.mxu0 0.0
        %965 = vmatmul.mubr.f32.gmra.mrb[0].mxu0 %v869
        %v966 = vpop.f32.mrb[0].mxu0
        %v967 = vadd.f32 0.0, %v966
        %v968 = vpop.f32.mrb[0].mxu0
        %969 = vmatprep.mubr.f32.mxu0 0.0
        %970 = vmatmul.mubr.f32.gmra.mrb[0].mxu0 %v872
        %v971 = vpop.f32.mrb[0].mxu0
        %v972 = vadd.f32 0.0, %v971
        %v973 = vpop.f32.mrb[0].mxu0
        %974 = vmatprep.mubr.f32.mxu0 0.0
        %975 = vmatmul.mubr.f32.gmra.mrb[0].mxu0 %v875
        %v976 = vpop.f32.mrb[0].mxu0
        %v977 = vadd.f32 0.0, %v976
        %v978 = vpop.f32.mrb[0].mxu0
        %979 = vmatprep.mubr.f32.mxu0 0.0
        %980 = vmatmul.mubr.f32.gmra.mrb[0].mxu0 %v878
        %v981 = vpop.f32.mrb[0].mxu0
        %v982 = vadd.f32 0.0, %v981
        %v983 = vpop.f32.mrb[0].mxu0
        %984 = vdwg.mxu0
        %v985 = vld [vmem:[#allocation3] sm:$0xff]
        %v986 = vld [vmem:[#allocation3 + $0x8] sm:$0xff]
        %v987 = vld [vmem:[#allocation3 + $0x10] sm:$0xff]
        %v988 = vld [vmem:[#allocation3 + $0x18] sm:$0xff]
        %v989 = vld [vmem:[#allocation3 + $0x20] sm:$0xff]
        %v990 = vld [vmem:[#allocation3 + $0x28] sm:$0xff]
        %v991 = vld [vmem:[#allocation3 + $0x30] sm:$0xff]
        %v992 = vld [vmem:[#allocation3 + $0x38] sm:$0xff]
        %v993 = vadd.f32 %v985, %v947
        %v994 = vadd.f32 %v986, %v952
        %v995 = vadd.f32 %v987, %v957
        %v996 = vadd.f32 %v988, %v962
        %v997 = vadd.f32 %v989, %v967
        %v998 = vadd.f32 %v990, %v972
        %v999 = vadd.f32 %v991, %v977
        %v1000 = vadd.f32 %v992, %v982
        %1001 = vst.msk [vmem:[#allocation3] sm:$0xff] %vm180, %v993
        %1002 = vst.msk [vmem:[#allocation3 + $0x8] sm:$0xff] %vm180, %v994
        %1003 = vst.msk [vmem:[#allocation3 + $0x10] sm:$0xff] %vm180, %v995
        %1004 = vst.msk [vmem:[#allocation3 + $0x18] sm:$0xff] %vm180, %v996
        %1005 = vst.msk [vmem:[#allocation3 + $0x20] sm:$0xff] %vm180, %v997
        %1006 = vst.msk [vmem:[#allocation3 + $0x28] sm:$0xff] %vm180, %v998
        %1007 = vst.msk [vmem:[#allocation3 + $0x30] sm:$0xff] %vm180, %v999
        %1008 = vst.msk [vmem:[#allocation3 + $0x38] sm:$0xff] %vm180, %v1000
        %v1009 = vld [vmem:[#allocation2 + $0x9] sm:$0xff]
        %v1010 = vld [vmem:[#allocation2 + $0x11] sm:$0xff]
        %v1011 = vld [vmem:[#allocation2 + $0x29] sm:$0xff]
        %v1012 = vld [vmem:[#allocation2 + $0x31] sm:$0xff]
        %v1013 = vld [vmem:[#allocation2 + $0x49] sm:$0xff]
        %v1014 = vld [vmem:[#allocation2 + $0x51] sm:$0xff]
        %v1015 = vld [vmem:[#allocation2 + $0x69] sm:$0xff]
        %v1016 = vld [vmem:[#allocation2 + $0x71] sm:$0xff]
        %s1017 = scalar_lea.vmem [#allocation4], 80
        %v1018 = vld [vmem:[%s1017] sm:$0xff]
        %v1019 = vld [vmem:[%s1017 + $0x8] sm:$0xff]
        %v1021 = vsel %vm180, %v1009, 0
        %v1024 = vsel %vm180, %v1010, 0
        %v1027 = vsel %vm180, %v1011, 0
        %v1030 = vsel %vm180, %v1012, 0
        %v1033 = vsel %vm180, %v1013, 0
        %v1036 = vsel %vm180, %v1014, 0
        %v1039 = vsel %vm180, %v1015, 0
        %v1042 = vsel %vm180, %v1016, 0
        %1044 = vmatprep.subr.mxu0 0.0
        %1045 = vmatpush1.msra.mxu0 %v1018
        %1046 = vmatprep.subr.mxu0 0.0
        %1047 = vmatpush1.msra.mxu0 %v1019
        %1048 = vmatprep.subr.mxu0 0.0
        %1049 = vmatpush1.msra.mxu0 0.0
        %1050 = vmatprep.subr.mxu0 0.0
        %1051 = vmatpush1.msra.mxu0 0.0
        %1052 = vmatprep.subr.mxu0 0.0
        %1053 = vmatpush1.msra.mxu0 0.0
        %1054 = vmatprep.subr.mxu0 0.0
        %1055 = vmatpush1.msra.mxu0 0.0
        %1056 = vmatprep.subr.mxu0 0.0
        %1057 = vmatpush1.msra.mxu0 0.0
        %1058 = vmatprep.subr.mxu0 0.0
        %1059 = vmatpush1.msra.mxu0 0.0
        %1060 = vmatprep.subr.mxu0 0.0
        %1061 = vmatpush1.msra.mxu0 0.0
        %1062 = vmatprep.subr.mxu0 0.0
        %1063 = vmatpush1.msra.mxu0 0.0
        %1064 = vmatprep.subr.mxu0 0.0
        %1065 = vmatpush1.msra.mxu0 0.0
        %1066 = vmatprep.subr.mxu0 0.0
        %1067 = vmatpush1.msra.mxu0 0.0
        %1068 = vmatprep.subr.mxu0 0.0
        %1069 = vmatpush1.msra.mxu0 0.0
        %1070 = vmatprep.subr.mxu0 0.0
        %1071 = vmatpush1.msra.mxu0 0.0
        %1072 = vmatprep.subr.mxu0 0.0
        %1073 = vmatpush1.msra.mxu0 0.0
        %1074 = vmatprep.subr.mxu0 0.0
        %1075 = vmatpush1.msra.mxu0 0.0
        %1076 = vmatprep.subr.mxu0 0.0
        %1077 = vmatpush1.msra.mxu0 0.0
        %1078 = vmatprep.subr.mxu0 0.0
        %1079 = vmatpush1.msra.mxu0 0.0
        %1080 = vmatprep.subr.mxu0 0.0
        %1081 = vmatpush1.msra.mxu0 0.0
        %1082 = vmatprep.subr.mxu0 0.0
        %1083 = vmatpush1.msra.mxu0 0.0
        %1084 = vmatprep.subr.mxu0 0.0
        %1085 = vmatpush1.msra.mxu0 0.0
        %1086 = vmatprep.subr.mxu0 0.0
        %1087 = vmatpush1.msra.mxu0 0.0
        %1088 = vmatprep.subr.mxu0 0.0
        %1089 = vmatpush1.msra.mxu0 0.0
        %1090 = vmatprep.subr.mxu0 0.0
        %1091 = vmatpush1.msra.mxu0 0.0
        %1092 = vmatprep.subr.mxu0 0.0
        %1093 = vmatpush1.msra.mxu0 0.0
        %1094 = vmatprep.subr.mxu0 0.0
        %1095 = vmatpush1.msra.mxu0 0.0
        %1096 = vmatprep.subr.mxu0 0.0
        %1097 = vmatpush1.msra.mxu0 0.0
        %1098 = vmatprep.subr.mxu0 0.0
        %1099 = vmatpush1.msra.mxu0 0.0
        %1100 = vmatprep.subr.mxu0 0.0
        %1101 = vmatpush1.msra.mxu0 0.0
        %1102 = vmatprep.subr.mxu0 0.0
        %1103 = vmatpush1.msra.mxu0 0.0
        %1104 = vmatprep.subr.mxu0 0.0
        %1105 = vmatpush1.msra.mxu0 0.0
        %1106 = vmatprep.subr.mxu0 0.0
        %1107 = vmatpush1.msra.mxu0 0.0
        %1108 = vmatprep.mubr.f32.mxu0 0.0
        %1109 = vmatmul.mubr.f32.gmra.mrb[0].mxu0 %v1021
        %v1110 = vpop.f32.mrb[0].mxu0
        %v1111 = vadd.f32 0.0, %v1110
        %v1112 = vpop.f32.mrb[0].mxu0
        %1113 = vmatprep.mubr.f32.mxu0 0.0
        %1114 = vmatmul.mubr.f32.gmra.mrb[0].mxu0 %v1024
        %v1115 = vpop.f32.mrb[0].mxu0
        %v1116 = vadd.f32 0.0, %v1115
        %v1117 = vpop.f32.mrb[0].mxu0
        %1118 = vmatprep.mubr.f32.mxu0 0.0
        %1119 = vmatmul.mubr.f32.gmra.mrb[0].mxu0 %v1027
        %v1120 = vpop.f32.mrb[0].mxu0
        %v1121 = vadd.f32 0.0, %v1120
        %v1122 = vpop.f32.mrb[0].mxu0
        %1123 = vmatprep.mubr.f32.mxu0 0.0
        %1124 = vmatmul.mubr.f32.gmra.mrb[0].mxu0 %v1030
        %v1125 = vpop.f32.mrb[0].mxu0
        %v1126 = vadd.f32 0.0, %v1125
        %v1127 = vpop.f32.mrb[0].mxu0
        %1128 = vmatprep.mubr.f32.mxu0 0.0
        %1129 = vmatmul.mubr.f32.gmra.mrb[0].mxu0 %v1033
        %v1130 = vpop.f32.mrb[0].mxu0
        %v1131 = vadd.f32 0.0, %v1130
        %v1132 = vpop.f32.mrb[0].mxu0
        %1133 = vmatprep.mubr.f32.mxu0 0.0
        %1134 = vmatmul.mubr.f32.gmra.mrb[0].mxu0 %v1036
        %v1135 = vpop.f32.mrb[0].mxu0
        %v1136 = vadd.f32 0.0, %v1135
        %v1137 = vpop.f32.mrb[0].mxu0
        %1138 = vmatprep.mubr.f32.mxu0 0.0
        %1139 = vmatmul.mubr.f32.gmra.mrb[0].mxu0 %v1039
        %v1140 = vpop.f32.mrb[0].mxu0
        %v1141 = vadd.f32 0.0, %v1140
        %v1142 = vpop.f32.mrb[0].mxu0
        %1143 = vmatprep.mubr.f32.mxu0 0.0
        %1144 = vmatmul.mubr.f32.gmra.mrb[0].mxu0 %v1042
        %v1145 = vpop.f32.mrb[0].mxu0
        %v1146 = vadd.f32 0.0, %v1145
        %v1147 = vpop.f32.mrb[0].mxu0
        %1148 = vdwg.mxu0
        %v1149 = vld [vmem:[#allocation3] sm:$0xff]
        %v1150 = vld [vmem:[#allocation3 + $0x8] sm:$0xff]
        %v1151 = vld [vmem:[#allocation3 + $0x10] sm:$0xff]
        %v1152 = vld [vmem:[#allocation3 + $0x18] sm:$0xff]
        %v1153 = vld [vmem:[#allocation3 + $0x20] sm:$0xff]
        %v1154 = vld [vmem:[#allocation3 + $0x28] sm:$0xff]
        %v1155 = vld [vmem:[#allocation3 + $0x30] sm:$0xff]
        %v1156 = vld [vmem:[#allocation3 + $0x38] sm:$0xff]
        %v1157 = vadd.f32 %v1149, %v1111
        %v1158 = vadd.f32 %v1150, %v1116
        %v1159 = vadd.f32 %v1151, %v1121
        %v1160 = vadd.f32 %v1152, %v1126
        %v1161 = vadd.f32 %v1153, %v1131
        %v1162 = vadd.f32 %v1154, %v1136
        %v1163 = vadd.f32 %v1155, %v1141
        %v1164 = vadd.f32 %v1156, %v1146
        %1165 = vst.msk [vmem:[#allocation3] sm:$0xff] %vm180, %v1157
        %1166 = vst.msk [vmem:[#allocation3 + $0x8] sm:$0xff] %vm180, %v1158
        %1167 = vst.msk [vmem:[#allocation3 + $0x10] sm:$0xff] %vm180, %v1159
        %1168 = vst.msk [vmem:[#allocation3 + $0x18] sm:$0xff] %vm180, %v1160
        %1169 = vst.msk [vmem:[#allocation3 + $0x20] sm:$0xff] %vm180, %v1161
        %1170 = vst.msk [vmem:[#allocation3 + $0x28] sm:$0xff] %vm180, %v1162
        %1171 = vst.msk [vmem:[#allocation3 + $0x30] sm:$0xff] %vm180, %v1163
        %1172 = vst.msk [vmem:[#allocation3 + $0x38] sm:$0xff] %vm180, %v1164
        %v1173 = vld [vmem:[#allocation2 + $0xa] sm:$0xff]
        %v1174 = vld [vmem:[#allocation2 + $0x12] sm:$0xff]
        %v1175 = vld [vmem:[#allocation2 + $0x2a] sm:$0xff]
        %v1176 = vld [vmem:[#allocation2 + $0x32] sm:$0xff]
        %v1177 = vld [vmem:[#allocation2 + $0x4a] sm:$0xff]
        %v1178 = vld [vmem:[#allocation2 + $0x52] sm:$0xff]
        %v1179 = vld [vmem:[#allocation2 + $0x6a] sm:$0xff]
        %v1180 = vld [vmem:[#allocation2 + $0x72] sm:$0xff]
        %s1181 = scalar_lea.vmem [#allocation4], 96
        %v1182 = vld [vmem:[%s1181] sm:$0xff]
        %v1183 = vld [vmem:[%s1181 + $0x8] sm:$0xff]
        %v1185 = vsel %vm180, %v1173, 0
        %v1188 = vsel %vm180, %v1174, 0
        %v1191 = vsel %vm180, %v1175, 0
        %v1194 = vsel %vm180, %v1176, 0
        %v1197 = vsel %vm180, %v1177, 0
        %v1200 = vsel %vm180, %v1178, 0
        %v1203 = vsel %vm180, %v1179, 0
        %v1206 = vsel %vm180, %v1180, 0
        %1208 = vmatprep.subr.mxu0 0.0
        %1209 = vmatpush1.msra.mxu0 %v1182
        %1210 = vmatprep.subr.mxu0 0.0
        %1211 = vmatpush1.msra.mxu0 %v1183
        %1212 = vmatprep.subr.mxu0 0.0
        %1213 = vmatpush1.msra.mxu0 0.0
        %1214 = vmatprep.subr.mxu0 0.0
        %1215 = vmatpush1.msra.mxu0 0.0
        %1216 = vmatprep.subr.mxu0 0.0
        %1217 = vmatpush1.msra.mxu0 0.0
        %1218 = vmatprep.subr.mxu0 0.0
        %1219 = vmatpush1.msra.mxu0 0.0
        %1220 = vmatprep.subr.mxu0 0.0
        %1221 = vmatpush1.msra.mxu0 0.0
        %1222 = vmatprep.subr.mxu0 0.0
        %1223 = vmatpush1.msra.mxu0 0.0
        %1224 = vmatprep.subr.mxu0 0.0
        %1225 = vmatpush1.msra.mxu0 0.0
        %1226 = vmatprep.subr.mxu0 0.0
        %1227 = vmatpush1.msra.mxu0 0.0
        %1228 = vmatprep.subr.mxu0 0.0
        %1229 = vmatpush1.msra.mxu0 0.0
        %1230 = vmatprep.subr.mxu0 0.0
        %1231 = vmatpush1.msra.mxu0 0.0
        %1232 = vmatprep.subr.mxu0 0.0
        %1233 = vmatpush1.msra.mxu0 0.0
        %1234 = vmatprep.subr.mxu0 0.0
        %1235 = vmatpush1.msra.mxu0 0.0
        %1236 = vmatprep.subr.mxu0 0.0
        %1237 = vmatpush1.msra.mxu0 0.0
        %1238 = vmatprep.subr.mxu0 0.0
        %1239 = vmatpush1.msra.mxu0 0.0
        %1240 = vmatprep.subr.mxu0 0.0
        %1241 = vmatpush1.msra.mxu0 0.0
        %1242 = vmatprep.subr.mxu0 0.0
        %1243 = vmatpush1.msra.mxu0 0.0
        %1244 = vmatprep.subr.mxu0 0.0
        %1245 = vmatpush1.msra.mxu0 0.0
        %1246 = vmatprep.subr.mxu0 0.0
        %1247 = vmatpush1.msra.mxu0 0.0
        %1248 = vmatprep.subr.mxu0 0.0
        %1249 = vmatpush1.msra.mxu0 0.0
        %1250 = vmatprep.subr.mxu0 0.0
        %1251 = vmatpush1.msra.mxu0 0.0
        %1252 = vmatprep.subr.mxu0 0.0
        %1253 = vmatpush1.msra.mxu0 0.0
        %1254 = vmatprep.subr.mxu0 0.0
        %1255 = vmatpush1.msra.mxu0 0.0
        %1256 = vmatprep.subr.mxu0 0.0
        %1257 = vmatpush1.msra.mxu0 0.0
        %1258 = vmatprep.subr.mxu0 0.0
        %1259 = vmatpush1.msra.mxu0 0.0
        %1260 = vmatprep.subr.mxu0 0.0
        %1261 = vmatpush1.msra.mxu0 0.0
        %1262 = vmatprep.subr.mxu0 0.0
        %1263 = vmatpush1.msra.mxu0 0.0
        %1264 = vmatprep.subr.mxu0 0.0
        %1265 = vmatpush1.msra.mxu0 0.0
        %1266 = vmatprep.subr.mxu0 0.0
        %1267 = vmatpush1.msra.mxu0 0.0
        %1268 = vmatprep.subr.mxu0 0.0
        %1269 = vmatpush1.msra.mxu0 0.0
        %1270 = vmatprep.subr.mxu0 0.0
        %1271 = vmatpush1.msra.mxu0 0.0
        %1272 = vmatprep.mubr.f32.mxu0 0.0
        %1273 = vmatmul.mubr.f32.gmra.mrb[0].mxu0 %v1185
        %v1274 = vpop.f32.mrb[0].mxu0
        %v1275 = vadd.f32 0.0, %v1274
        %v1276 = vpop.f32.mrb[0].mxu0
        %1277 = vmatprep.mubr.f32.mxu0 0.0
        %1278 = vmatmul.mubr.f32.gmra.mrb[0].mxu0 %v1188
        %v1279 = vpop.f32.mrb[0].mxu0
        %v1280 = vadd.f32 0.0, %v1279
        %v1281 = vpop.f32.mrb[0].mxu0
        %1282 = vmatprep.mubr.f32.mxu0 0.0
        %1283 = vmatmul.mubr.f32.gmra.mrb[0].mxu0 %v1191
        %v1284 = vpop.f32.mrb[0].mxu0
        %v1285 = vadd.f32 0.0, %v1284
        %v1286 = vpop.f32.mrb[0].mxu0
        %1287 = vmatprep.mubr.f32.mxu0 0.0
        %1288 = vmatmul.mubr.f32.gmra.mrb[0].mxu0 %v1194
        %v1289 = vpop.f32.mrb[0].mxu0
        %v1290 = vadd.f32 0.0, %v1289
        %v1291 = vpop.f32.mrb[0].mxu0
        %1292 = vmatprep.mubr.f32.mxu0 0.0
        %1293 = vmatmul.mubr.f32.gmra.mrb[0].mxu0 %v1197
        %v1294 = vpop.f32.mrb[0].mxu0
        %v1295 = vadd.f32 0.0, %v1294
        %v1296 = vpop.f32.mrb[0].mxu0
        %1297 = vmatprep.mubr.f32.mxu0 0.0
        %1298 = vmatmul.mubr.f32.gmra.mrb[0].mxu0 %v1200
        %v1299 = vpop.f32.mrb[0].mxu0
        %v1300 = vadd.f32 0.0, %v1299
        %v1301 = vpop.f32.mrb[0].mxu0
        %1302 = vmatprep.mubr.f32.mxu0 0.0
        %1303 = vmatmul.mubr.f32.gmra.mrb[0].mxu0 %v1203
        %v1304 = vpop.f32.mrb[0].mxu0
        %v1305 = vadd.f32 0.0, %v1304
        %v1306 = vpop.f32.mrb[0].mxu0
        %1307 = vmatprep.mubr.f32.mxu0 0.0
        %1308 = vmatmul.mubr.f32.gmra.mrb[0].mxu0 %v1206
        %v1309 = vpop.f32.mrb[0].mxu0
        %v1310 = vadd.f32 0.0, %v1309
        %v1311 = vpop.f32.mrb[0].mxu0
        %1312 = vdwg.mxu0
        %v1313 = vld [vmem:[#allocation3] sm:$0xff]
        %v1314 = vld [vmem:[#allocation3 + $0x8] sm:$0xff]
        %v1315 = vld [vmem:[#allocation3 + $0x10] sm:$0xff]
        %v1316 = vld [vmem:[#allocation3 + $0x18] sm:$0xff]
        %v1317 = vld [vmem:[#allocation3 + $0x20] sm:$0xff]
        %v1318 = vld [vmem:[#allocation3 + $0x28] sm:$0xff]
        %v1319 = vld [vmem:[#allocation3 + $0x30] sm:$0xff]
        %v1320 = vld [vmem:[#allocation3 + $0x38] sm:$0xff]
        %v1321 = vadd.f32 %v1313, %v1275
        %v1322 = vadd.f32 %v1314, %v1280
        %v1323 = vadd.f32 %v1315, %v1285
        %v1324 = vadd.f32 %v1316, %v1290
        %v1325 = vadd.f32 %v1317, %v1295
        %v1326 = vadd.f32 %v1318, %v1300
        %v1327 = vadd.f32 %v1319, %v1305
        %v1328 = vadd.f32 %v1320, %v1310
        %1329 = vst.msk [vmem:[#allocation3] sm:$0xff] %vm180, %v1321
        %1330 = vst.msk [vmem:[#allocation3 + $0x8] sm:$0xff] %vm180, %v1322
        %1331 = vst.msk [vmem:[#allocation3 + $0x10] sm:$0xff] %vm180, %v1323
        %1332 = vst.msk [vmem:[#allocation3 + $0x18] sm:$0xff] %vm180, %v1324
        %1333 = vst.msk [vmem:[#allocation3 + $0x20] sm:$0xff] %vm180, %v1325
        %1334 = vst.msk [vmem:[#allocation3 + $0x28] sm:$0xff] %vm180, %v1326
        %1335 = vst.msk [vmem:[#allocation3 + $0x30] sm:$0xff] %vm180, %v1327
        %1336 = vst.msk [vmem:[#allocation3 + $0x38] sm:$0xff] %vm180, %v1328
        %v1337 = vld [vmem:[#allocation2 + $0xb] sm:$0xff]
        %v1338 = vld [vmem:[#allocation2 + $0x13] sm:$0xff]
        %v1339 = vld [vmem:[#allocation2 + $0x2b] sm:$0xff]
        %v1340 = vld [vmem:[#allocation2 + $0x33] sm:$0xff]
        %v1341 = vld [vmem:[#allocation2 + $0x4b] sm:$0xff]
        %v1342 = vld [vmem:[#allocation2 + $0x53] sm:$0xff]
        %v1343 = vld [vmem:[#allocation2 + $0x6b] sm:$0xff]
        %v1344 = vld [vmem:[#allocation2 + $0x73] sm:$0xff]
        %s1345 = scalar_lea.vmem [#allocation4], 112
        %v1346 = vld [vmem:[%s1345] sm:$0xff]
        %v1347 = vld [vmem:[%s1345 + $0x8] sm:$0xff]
        %v1349 = vsel %vm180, %v1337, 0
        %v1352 = vsel %vm180, %v1338, 0
        %v1355 = vsel %vm180, %v1339, 0
        %v1358 = vsel %vm180, %v1340, 0
        %v1361 = vsel %vm180, %v1341, 0
        %v1364 = vsel %vm180, %v1342, 0
        %v1367 = vsel %vm180, %v1343, 0
        %v1370 = vsel %vm180, %v1344, 0
        %1372 = vmatprep.subr.mxu0 0.0
        %1373 = vmatpush1.msra.mxu0 %v1346
        %1374 = vmatprep.subr.mxu0 0.0
        %1375 = vmatpush1.msra.mxu0 %v1347
        %1376 = vmatprep.subr.mxu0 0.0
        %1377 = vmatpush1.msra.mxu0 0.0
        %1378 = vmatprep.subr.mxu0 0.0
        %1379 = vmatpush1.msra.mxu0 0.0
        %1380 = vmatprep.subr.mxu0 0.0
        %1381 = vmatpush1.msra.mxu0 0.0
        %1382 = vmatprep.subr.mxu0 0.0
        %1383 = vmatpush1.msra.mxu0 0.0
        %1384 = vmatprep.subr.mxu0 0.0
        %1385 = vmatpush1.msra.mxu0 0.0
        %1386 = vmatprep.subr.mxu0 0.0
        %1387 = vmatpush1.msra.mxu0 0.0
        %1388 = vmatprep.subr.mxu0 0.0
        %1389 = vmatpush1.msra.mxu0 0.0
        %1390 = vmatprep.subr.mxu0 0.0
        %1391 = vmatpush1.msra.mxu0 0.0
        %1392 = vmatprep.subr.mxu0 0.0
        %1393 = vmatpush1.msra.mxu0 0.0
        %1394 = vmatprep.subr.mxu0 0.0
        %1395 = vmatpush1.msra.mxu0 0.0
        %1396 = vmatprep.subr.mxu0 0.0
        %1397 = vmatpush1.msra.mxu0 0.0
        %1398 = vmatprep.subr.mxu0 0.0
        %1399 = vmatpush1.msra.mxu0 0.0
        %1400 = vmatprep.subr.mxu0 0.0
        %1401 = vmatpush1.msra.mxu0 0.0
        %1402 = vmatprep.subr.mxu0 0.0
        %1403 = vmatpush1.msra.mxu0 0.0
        %1404 = vmatprep.subr.mxu0 0.0
        %1405 = vmatpush1.msra.mxu0 0.0
        %1406 = vmatprep.subr.mxu0 0.0
        %1407 = vmatpush1.msra.mxu0 0.0
        %1408 = vmatprep.subr.mxu0 0.0
        %1409 = vmatpush1.msra.mxu0 0.0
        %1410 = vmatprep.subr.mxu0 0.0
        %1411 = vmatpush1.msra.mxu0 0.0
        %1412 = vmatprep.subr.mxu0 0.0
        %1413 = vmatpush1.msra.mxu0 0.0
        %1414 = vmatprep.subr.mxu0 0.0
        %1415 = vmatpush1.msra.mxu0 0.0
        %1416 = vmatprep.subr.mxu0 0.0
        %1417 = vmatpush1.msra.mxu0 0.0
        %1418 = vmatprep.subr.mxu0 0.0
        %1419 = vmatpush1.msra.mxu0 0.0
        %1420 = vmatprep.subr.mxu0 0.0
        %1421 = vmatpush1.msra.mxu0 0.0
        %1422 = vmatprep.subr.mxu0 0.0
        %1423 = vmatpush1.msra.mxu0 0.0
        %1424 = vmatprep.subr.mxu0 0.0
        %1425 = vmatpush1.msra.mxu0 0.0
        %1426 = vmatprep.subr.mxu0 0.0
        %1427 = vmatpush1.msra.mxu0 0.0
        %1428 = vmatprep.subr.mxu0 0.0
        %1429 = vmatpush1.msra.mxu0 0.0
        %1430 = vmatprep.subr.mxu0 0.0
        %1431 = vmatpush1.msra.mxu0 0.0
        %1432 = vmatprep.subr.mxu0 0.0
        %1433 = vmatpush1.msra.mxu0 0.0
        %1434 = vmatprep.subr.mxu0 0.0
        %1435 = vmatpush1.msra.mxu0 0.0
        %1436 = vmatprep.mubr.f32.mxu0 0.0
        %1437 = vmatmul.mubr.f32.gmra.mrb[0].mxu0 %v1349
        %v1438 = vpop.f32.mrb[0].mxu0
        %v1439 = vadd.f32 0.0, %v1438
        %v1440 = vpop.f32.mrb[0].mxu0
        %1441 = vmatprep.mubr.f32.mxu0 0.0
        %1442 = vmatmul.mubr.f32.gmra.mrb[0].mxu0 %v1352
        %v1443 = vpop.f32.mrb[0].mxu0
        %v1444 = vadd.f32 0.0, %v1443
        %v1445 = vpop.f32.mrb[0].mxu0
        %1446 = vmatprep.mubr.f32.mxu0 0.0
        %1447 = vmatmul.mubr.f32.gmra.mrb[0].mxu0 %v1355
        %v1448 = vpop.f32.mrb[0].mxu0
        %v1449 = vadd.f32 0.0, %v1448
        %v1450 = vpop.f32.mrb[0].mxu0
        %1451 = vmatprep.mubr.f32.mxu0 0.0
        %1452 = vmatmul.mubr.f32.gmra.mrb[0].mxu0 %v1358
        %v1453 = vpop.f32.mrb[0].mxu0
        %v1454 = vadd.f32 0.0, %v1453
        %v1455 = vpop.f32.mrb[0].mxu0
        %1456 = vmatprep.mubr.f32.mxu0 0.0
        %1457 = vmatmul.mubr.f32.gmra.mrb[0].mxu0 %v1361
        %v1458 = vpop.f32.mrb[0].mxu0
        %v1459 = vadd.f32 0.0, %v1458
        %v1460 = vpop.f32.mrb[0].mxu0
        %1461 = vmatprep.mubr.f32.mxu0 0.0
        %1462 = vmatmul.mubr.f32.gmra.mrb[0].mxu0 %v1364
        %v1463 = vpop.f32.mrb[0].mxu0
        %v1464 = vadd.f32 0.0, %v1463
        %v1465 = vpop.f32.mrb[0].mxu0
        %1466 = vmatprep.mubr.f32.mxu0 0.0
        %1467 = vmatmul.mubr.f32.gmra.mrb[0].mxu0 %v1367
        %v1468 = vpop.f32.mrb[0].mxu0
        %v1469 = vadd.f32 0.0, %v1468
        %v1470 = vpop.f32.mrb[0].mxu0
        %1471 = vmatprep.mubr.f32.mxu0 0.0
        %1472 = vmatmul.mubr.f32.gmra.mrb[0].mxu0 %v1370
        %v1473 = vpop.f32.mrb[0].mxu0
        %v1474 = vadd.f32 0.0, %v1473
        %v1475 = vpop.f32.mrb[0].mxu0
        %1476 = vdwg.mxu0
        %v1477 = vld [vmem:[#allocation3] sm:$0xff]
        %v1478 = vld [vmem:[#allocation3 + $0x8] sm:$0xff]
        %v1479 = vld [vmem:[#allocation3 + $0x10] sm:$0xff]
        %v1480 = vld [vmem:[#allocation3 + $0x18] sm:$0xff]
        %v1481 = vld [vmem:[#allocation3 + $0x20] sm:$0xff]
        %v1482 = vld [vmem:[#allocation3 + $0x28] sm:$0xff]
        %v1483 = vld [vmem:[#allocation3 + $0x30] sm:$0xff]
        %v1484 = vld [vmem:[#allocation3 + $0x38] sm:$0xff]
        %v1485 = vadd.f32 %v1477, %v1439
        %v1486 = vadd.f32 %v1478, %v1444
        %v1487 = vadd.f32 %v1479, %v1449
        %v1488 = vadd.f32 %v1480, %v1454
        %v1489 = vadd.f32 %v1481, %v1459
        %v1490 = vadd.f32 %v1482, %v1464
        %v1491 = vadd.f32 %v1483, %v1469
        %v1492 = vadd.f32 %v1484, %v1474
        %1493 = vst.msk [vmem:[#allocation3] sm:$0xff] %vm180, %v1485
        %1494 = vst.msk [vmem:[#allocation3 + $0x8] sm:$0xff] %vm180, %v1486
        %1495 = vst.msk [vmem:[#allocation3 + $0x10] sm:$0xff] %vm180, %v1487
        %1496 = vst.msk [vmem:[#allocation3 + $0x18] sm:$0xff] %vm180, %v1488
        %1497 = vst.msk [vmem:[#allocation3 + $0x20] sm:$0xff] %vm180, %v1489
        %1498 = vst.msk [vmem:[#allocation3 + $0x28] sm:$0xff] %vm180, %v1490
        %1499 = vst.msk [vmem:[#allocation3 + $0x30] sm:$0xff] %vm180, %v1491
        %1500 = vst.msk [vmem:[#allocation3 + $0x38] sm:$0xff] %vm180, %v1492
        %v1501 = vld [vmem:[#allocation2 + $0xc] sm:$0xff]
        %v1502 = vld [vmem:[#allocation2 + $0x14] sm:$0xff]
        %v1503 = vld [vmem:[#allocation2 + $0x2c] sm:$0xff]
        %v1504 = vld [vmem:[#allocation2 + $0x34] sm:$0xff]
        %v1505 = vld [vmem:[#allocation2 + $0x4c] sm:$0xff]
        %v1506 = vld [vmem:[#allocation2 + $0x54] sm:$0xff]
        %v1507 = vld [vmem:[#allocation2 + $0x6c] sm:$0xff]
        %v1508 = vld [vmem:[#allocation2 + $0x74] sm:$0xff]
        %s1509 = scalar_lea.vmem [#allocation4], 128
        %v1510 = vld [vmem:[%s1509] sm:$0xff]
        %v1511 = vld [vmem:[%s1509 + $0x8] sm:$0xff]
        %v1513 = vsel %vm180, %v1501, 0
        %v1516 = vsel %vm180, %v1502, 0
        %v1519 = vsel %vm180, %v1503, 0
        %v1522 = vsel %vm180, %v1504, 0
        %v1525 = vsel %vm180, %v1505, 0
        %v1528 = vsel %vm180, %v1506, 0
        %v1531 = vsel %vm180, %v1507, 0
        %v1534 = vsel %vm180, %v1508, 0
        %1536 = vmatprep.subr.mxu0 0.0
        %1537 = vmatpush1.msra.mxu0 %v1510
        %1538 = vmatprep.subr.mxu0 0.0
        %1539 = vmatpush1.msra.mxu0 %v1511
        %1540 = vmatprep.subr.mxu0 0.0
        %1541 = vmatpush1.msra.mxu0 0.0
        %1542 = vmatprep.subr.mxu0 0.0
        %1543 = vmatpush1.msra.mxu0 0.0
        %1544 = vmatprep.subr.mxu0 0.0
        %1545 = vmatpush1.msra.mxu0 0.0
        %1546 = vmatprep.subr.mxu0 0.0
        %1547 = vmatpush1.msra.mxu0 0.0
        %1548 = vmatprep.subr.mxu0 0.0
        %1549 = vmatpush1.msra.mxu0 0.0
        %1550 = vmatprep.subr.mxu0 0.0
        %1551 = vmatpush1.msra.mxu0 0.0
        %1552 = vmatprep.subr.mxu0 0.0
        %1553 = vmatpush1.msra.mxu0 0.0
        %1554 = vmatprep.subr.mxu0 0.0
        %1555 = vmatpush1.msra.mxu0 0.0
        %1556 = vmatprep.subr.mxu0 0.0
        %1557 = vmatpush1.msra.mxu0 0.0
        %1558 = vmatprep.subr.mxu0 0.0
        %1559 = vmatpush1.msra.mxu0 0.0
        %1560 = vmatprep.subr.mxu0 0.0
        %1561 = vmatpush1.msra.mxu0 0.0
        %1562 = vmatprep.subr.mxu0 0.0
        %1563 = vmatpush1.msra.mxu0 0.0
        %1564 = vmatprep.subr.mxu0 0.0
        %1565 = vmatpush1.msra.mxu0 0.0
        %1566 = vmatprep.subr.mxu0 0.0
        %1567 = vmatpush1.msra.mxu0 0.0
        %1568 = vmatprep.subr.mxu0 0.0
        %1569 = vmatpush1.msra.mxu0 0.0
        %1570 = vmatprep.subr.mxu0 0.0
        %1571 = vmatpush1.msra.mxu0 0.0
        %1572 = vmatprep.subr.mxu0 0.0
        %1573 = vmatpush1.msra.mxu0 0.0
        %1574 = vmatprep.subr.mxu0 0.0
        %1575 = vmatpush1.msra.mxu0 0.0
        %1576 = vmatprep.subr.mxu0 0.0
        %1577 = vmatpush1.msra.mxu0 0.0
        %1578 = vmatprep.subr.mxu0 0.0
        %1579 = vmatpush1.msra.mxu0 0.0
        %1580 = vmatprep.subr.mxu0 0.0
        %1581 = vmatpush1.msra.mxu0 0.0
        %1582 = vmatprep.subr.mxu0 0.0
        %1583 = vmatpush1.msra.mxu0 0.0
        %1584 = vmatprep.subr.mxu0 0.0
        %1585 = vmatpush1.msra.mxu0 0.0
        %1586 = vmatprep.subr.mxu0 0.0
        %1587 = vmatpush1.msra.mxu0 0.0
        %1588 = vmatprep.subr.mxu0 0.0
        %1589 = vmatpush1.msra.mxu0 0.0
        %1590 = vmatprep.subr.mxu0 0.0
        %1591 = vmatpush1.msra.mxu0 0.0
        %1592 = vmatprep.subr.mxu0 0.0
        %1593 = vmatpush1.msra.mxu0 0.0
        %1594 = vmatprep.subr.mxu0 0.0
        %1595 = vmatpush1.msra.mxu0 0.0
        %1596 = vmatprep.subr.mxu0 0.0
        %1597 = vmatpush1.msra.mxu0 0.0
        %1598 = vmatprep.subr.mxu0 0.0
        %1599 = vmatpush1.msra.mxu0 0.0
        %1600 = vmatprep.mubr.f32.mxu0 0.0
        %1601 = vmatmul.mubr.f32.gmra.mrb[0].mxu0 %v1513
        %v1602 = vpop.f32.mrb[0].mxu0
        %v1603 = vadd.f32 0.0, %v1602
        %v1604 = vpop.f32.mrb[0].mxu0
        %1605 = vmatprep.mubr.f32.mxu0 0.0
        %1606 = vmatmul.mubr.f32.gmra.mrb[0].mxu0 %v1516
        %v1607 = vpop.f32.mrb[0].mxu0
        %v1608 = vadd.f32 0.0, %v1607
        %v1609 = vpop.f32.mrb[0].mxu0
        %1610 = vmatprep.mubr.f32.mxu0 0.0
        %1611 = vmatmul.mubr.f32.gmra.mrb[0].mxu0 %v1519
        %v1612 = vpop.f32.mrb[0].mxu0
        %v1613 = vadd.f32 0.0, %v1612
        %v1614 = vpop.f32.mrb[0].mxu0
        %1615 = vmatprep.mubr.f32.mxu0 0.0
        %1616 = vmatmul.mubr.f32.gmra.mrb[0].mxu0 %v1522
        %v1617 = vpop.f32.mrb[0].mxu0
        %v1618 = vadd.f32 0.0, %v1617
        %v1619 = vpop.f32.mrb[0].mxu0
        %1620 = vmatprep.mubr.f32.mxu0 0.0
        %1621 = vmatmul.mubr.f32.gmra.mrb[0].mxu0 %v1525
        %v1622 = vpop.f32.mrb[0].mxu0
        %v1623 = vadd.f32 0.0, %v1622
        %v1624 = vpop.f32.mrb[0].mxu0
        %1625 = vmatprep.mubr.f32.mxu0 0.0
        %1626 = vmatmul.mubr.f32.gmra.mrb[0].mxu0 %v1528
        %v1627 = vpop.f32.mrb[0].mxu0
        %v1628 = vadd.f32 0.0, %v1627
        %v1629 = vpop.f32.mrb[0].mxu0
        %1630 = vmatprep.mubr.f32.mxu0 0.0
        %1631 = vmatmul.mubr.f32.gmra.mrb[0].mxu0 %v1531
        %v1632 = vpop.f32.mrb[0].mxu0
        %v1633 = vadd.f32 0.0, %v1632
        %v1634 = vpop.f32.mrb[0].mxu0
        %1635 = vmatprep.mubr.f32.mxu0 0.0
        %1636 = vmatmul.mubr.f32.gmra.mrb[0].mxu0 %v1534
        %v1637 = vpop.f32.mrb[0].mxu0
        %v1638 = vadd.f32 0.0, %v1637
        %v1639 = vpop.f32.mrb[0].mxu0
        %1640 = vdwg.mxu0
        %v1641 = vld [vmem:[#allocation3] sm:$0xff]
        %v1642 = vld [vmem:[#allocation3 + $0x8] sm:$0xff]
        %v1643 = vld [vmem:[#allocation3 + $0x10] sm:$0xff]
        %v1644 = vld [vmem:[#allocation3 + $0x18] sm:$0xff]
        %v1645 = vld [vmem:[#allocation3 + $0x20] sm:$0xff]
        %v1646 = vld [vmem:[#allocation3 + $0x28] sm:$0xff]
        %v1647 = vld [vmem:[#allocation3 + $0x30] sm:$0xff]
        %v1648 = vld [vmem:[#allocation3 + $0x38] sm:$0xff]
        %v1649 = vadd.f32 %v1641, %v1603
        %v1650 = vadd.f32 %v1642, %v1608
        %v1651 = vadd.f32 %v1643, %v1613
        %v1652 = vadd.f32 %v1644, %v1618
        %v1653 = vadd.f32 %v1645, %v1623
        %v1654 = vadd.f32 %v1646, %v1628
        %v1655 = vadd.f32 %v1647, %v1633
        %v1656 = vadd.f32 %v1648, %v1638
        %1657 = vst.msk [vmem:[#allocation3] sm:$0xff] %vm180, %v1649
        %1658 = vst.msk [vmem:[#allocation3 + $0x8] sm:$0xff] %vm180, %v1650
        %1659 = vst.msk [vmem:[#allocation3 + $0x10] sm:$0xff] %vm180, %v1651
        %1660 = vst.msk [vmem:[#allocation3 + $0x18] sm:$0xff] %vm180, %v1652
        %1661 = vst.msk [vmem:[#allocation3 + $0x20] sm:$0xff] %vm180, %v1653
        %1662 = vst.msk [vmem:[#allocation3 + $0x28] sm:$0xff] %vm180, %v1654
        %1663 = vst.msk [vmem:[#allocation3 + $0x30] sm:$0xff] %vm180, %v1655
        %1664 = vst.msk [vmem:[#allocation3 + $0x38] sm:$0xff] %vm180, %v1656
        %v1665 = vld [vmem:[#allocation3] sm:$0xff]
        %v1666 = vld [vmem:[#allocation3 + $0x8] sm:$0xff]
        %v1667 = vld [vmem:[#allocation3 + $0x10] sm:$0xff]
        %v1668 = vld [vmem:[#allocation3 + $0x18] sm:$0xff]
        %v1669 = vld [vmem:[#allocation3 + $0x20] sm:$0xff]
        %v1670 = vld [vmem:[#allocation3 + $0x28] sm:$0xff]
        %v1671 = vld [vmem:[#allocation3 + $0x30] sm:$0xff]
        %v1672 = vld [vmem:[#allocation3 + $0x38] sm:$0xff]
        %1673 = vst.msk [vmem:[%s177] sm:$0xff] %vm180, %v1665
        %1674 = vst.msk [vmem:[%s177 + $0x8] sm:$0xff] %vm180, %v1666
        %1675 = vst.msk [vmem:[%s177 + $0x10] sm:$0xff] %vm180, %v1667
        %1676 = vst.msk [vmem:[%s177 + $0x18] sm:$0xff] %vm180, %v1668
        %1677 = vst.msk [vmem:[%s177 + $0x20] sm:$0xff] %vm180, %v1669
        %1678 = vst.msk [vmem:[%s177 + $0x28] sm:$0xff] %vm180, %v1670
        %1679 = vst.msk [vmem:[%s177 + $0x30] sm:$0xff] %vm180, %v1671
        %1680 = vst.msk [vmem:[%s177 + $0x38] sm:$0xff] %vm180, %v1672
        %s1681 = sand.u32 %s75, 1
        %s1682 = scalar_lea.sflag [#allocation6], %s1681
        %s1683 = sand.u32 %s75, 1
        %s1684 = smul.addr %s1683, 64
        %s1685 = scalar_lea.vmem [#allocation9], %s1684
        // Predicated region
        $region37: #{tpu_custom_call.1} parent=27 // pred_check
          %p1686 = pneg %p85
        $region38: #{tpu_custom_call.1} parent=27 // pred_check_branch
          %1688 = sbr.rel (%p1686) target = $region40
        $region39: #{tpu_custom_call.1} parent=27 // pred_region
          %s1689 = smul.u32 4, %s20
          %s1691 = ssub.s32 1024, 1024
          %1692 = vsyncadd %s1682, %s1691
          %s1693 = smul.addr %s1689, 2
          %s1694 = smul.addr %s1693, 128
          %s1695 = scalar_lea.hbm %s2, %s1694
          %s1696 = sshll.u32 %s1685, 4
          %s1697 = int_to_ptr.vmem [resolvable:$true] %s1696
          %1702 = dma.vmem_to_hbm [thread:$0]  %s1697, 1024, %s1695, %s1682, 128, 128, 8
        $region40: #{tpu_custom_call.1} parent=27 // pred_fallthru
          _
      $region28: #{tpu_custom_call.1} parent=5 // pred_fallthru
        _
      %p1703 = scmp.le.s32.totalorder 2, %s15
      // Predicated region
      $region41: #{tpu_custom_call.1} parent=5 // pred_check
        %p1704 = pneg %p1703
      $region42: #{tpu_custom_call.1} parent=5 // pred_check_branch
        %1706 = sbr.rel (%p1704) target = $region44
      $region43: #{tpu_custom_call.1} parent=5 // pred_region
        %s1707 = ssub.s32 %s15, 2
        // Predicated region
        $region45: #{tpu_custom_call.1} parent=43 // pred_check
          %p1708 = pneg %p91
        $region46: #{tpu_custom_call.1} parent=43 // pred_check_branch
          %1710 = sbr.rel (%p1708) target = $region48
        $region47: #{tpu_custom_call.1} parent=43 // pred_region
          %s1711 = sand.u32 %s76, 1
          %s1712 = scalar_lea.sflag [#allocation6], %s1711
          %s1713 = sand.u32 %s76, 1
          %s1714 = smul.addr %s1713, 64
          %s1715 = scalar_lea.vmem [#allocation9], %s1714
          %1716 = dma.done %s1712, 1024
        $region48: #{tpu_custom_call.1} parent=43 // pred_fallthru
          _
      $region44: #{tpu_custom_call.1} parent=5 // pred_fallthru
        _
    $region6: #{tpu_custom_call.1} parent=1 // loop_footer
      %s19 = sadd.s32 1, %s15
    $region7: #{tpu_custom_call.1} parent=1 // loop_footer_branch
      %14 = sbr.rel target = $region3
    $region8: #{tpu_custom_call.1} parent=1 // loop_exit
      _
    %1717 = vsyncpa [#allocation5], 1
    %s1718 = scalar_lea.sflag [#allocation5], 1
    %1719 = vsyncpa %s1718, 1
    %1720 = vsyncpa [#allocation8], 1
    %s1721 = scalar_lea.sflag [#allocation8], 1
    %1722 = vsyncpa %s1721, 1
    %1723 = vsyncpa [#allocation6], 1
    %s1724 = scalar_lea.sflag [#allocation6], 1
    %1725 = vsyncpa %s1724, 1

</llo_original>
